<compile_context>
chip_gen: v6e
topology: v6e:2x2x1
jax: 0.10.0
libtpu: 0.0.40
codegen_flags: <defaults>
</compile_context>

<pallas_src>
import functools

import jax
import jax.numpy as jnp
import numpy as np
from jax import lax
from jax.experimental import pallas as pl
from jax.experimental.pallas import tpu as pltpu


# ----------------------------------------------------------------------------
# Fused Pallas kernel: 2-layer packed-bidirectional LSTM + Linear/ReLU + Linear
# ----------------------------------------------------------------------------
def _lstm_model_kernel(ucat_ref, w0_ref, whh0_ref, b0_ref,
                       w1_ref, whh1_ref, b1_ref,
                       linw_ref, linb_ref, fcw_ref, fcb_ref,
                       out_ref, *, T, B, H):
    H2 = 2 * H

    def dot(a, b):
        return jnp.dot(a, b, preferred_element_type=jnp.float32)

    def run_packed(xproj, whh):
        """Fused fwd+rev LSTM recurrence.

        xproj: (T*B, 8H) precomputed input projection (+bias); row block s holds
               the fwd gates for time t=s and the rev gates for time t=T-1-s,
               columns interleaved per gate: [i_f,i_r,f_f,f_r,g_f,g_r,o_f,o_r].
        whh:   (2H, 8H) block-diagonal packed recurrent weight
               (fwd rows 0:H -> fwd gate columns, rev rows H:2H -> rev columns).
        Returns a Python list of T vreg-resident (B, 2H) packed hidden states,
        hs[s] = [h_f(t=s) | h_r(t=T-1-s)].
        """
        h = jnp.zeros((B, H2), jnp.float32)
        c = jnp.zeros((B, H2), jnp.float32)
        hs = []
        for s in range(T):                                   # fully unrolled
            gates = xproj[s * B:(s + 1) * B, :] + dot(h, whh)       # (B, 8H)
            sig = jax.nn.sigmoid(gates)                      # full-vreg EUP
            tnh = jnp.tanh(gates)                            # full-vreg EUP
            i = sig[:, 0 * H2:1 * H2]
            f = sig[:, 1 * H2:2 * H2]
            g = tnh[:, 2 * H2:3 * H2]
            o = sig[:, 3 * H2:4 * H2]
            c = f * c + i * g
            h = o * jnp.tanh(c)
            hs.append(h)                                     # stays in vregs
        return hs

    ucat = ucat_ref[...]                                     # (T*B, 2*D_m)

    # ---- layer 0: single fused (T*B, 2*D_m) @ (2*D_m, 8H) input projection --
    hs0 = run_packed(dot(ucat, w0_ref[...]) + b0_ref[...], whh0_ref[...])

    # ---- layer 1: z1 row-block t = [hs0[t] | hs0[T-1-t]]; the row-permuted
    # packed w1 absorbs the fwd/rev time reassembly (no sub-vreg slicing) -----
    z1 = jnp.concatenate([jnp.concatenate(hs0, axis=0),
                          jnp.concatenate(hs0[::-1], axis=0)],
                         axis=-1)                            # (T*B, 4H)
    hs1 = run_packed(dot(z1, w1_ref[...]) + b1_ref[...], whh1_ref[...])

    # ---- fused head: relu(emotions @ lin_w + lin_b) @ fc_w.T + fc_b ---------
    z2 = jnp.concatenate([jnp.concatenate(hs1, axis=0),
                          jnp.concatenate(hs1[::-1], axis=0)],
                         axis=-1)                            # (T*B, 4H)
    hidden = jnp.maximum(dot(z2, linw_ref[...]) + linb_ref[...], 0.0)
    # dropout: eval-mode identity
    # Lane-dense output row: fc_w (1, D_h) contracted with hidden (T*B, D_h)
    # over D_h -> (1, T*B); the wrapper reshapes to (T, B, 1).
    out_ref[...] = lax.dot_general(
        fcw_ref[...], hidden,
        dimension_numbers=(((1,), (1,)), ((), ())),
        preferred_element_type=jnp.float32) + fcb_ref[...]


# ----------------------------------------------------------------------------
# Offline weight packing for the fused fwd+rev recurrence (done once)
# ----------------------------------------------------------------------------
def pack_params(params, D_m, D_e, D_h):
    """Packed gate-column layout (width 8H): [i_f,i_r,f_f,f_r,g_f,g_r,o_f,o_r]."""
    H = D_e
    z = lambda r, c: jnp.zeros((r, c), jnp.float32)

    def interleave(fwd, rev):
        # fwd/rev: (rows, 4H) producing fwd / rev gates -> (rows, 8H) interleaved
        cols = []
        for k in range(4):
            cols.append(fwd[:, k * H:(k + 1) * H])
            cols.append(rev[:, k * H:(k + 1) * H])
        return jnp.concatenate(cols, axis=1)

    def pack_recurrent(whh_f, whh_r):
        # packed carry rows: [h_f (H) | h_r (H)]  -> block-diagonal (2H, 8H)
        return interleave(jnp.concatenate([whh_f, z(H, 4 * H)], axis=0),
                          jnp.concatenate([z(H, 4 * H), whh_r], axis=0))

    # layer-0 input rows: [u(t) (D_m) | u(T-1-t) (D_m)]
    w0 = interleave(
        jnp.concatenate([params["w_ih_l0"], z(D_m, 4 * H)], axis=0),
        jnp.concatenate([z(D_m, 4 * H), params["w_ih_l0r"]], axis=0))
    b0 = interleave(params["b_l0"], params["b_l0r"])
    whh0 = pack_recurrent(params["w_hh_l0"], params["w_hh_l0r"])

    # layer-1 input rows (z1): [h0f(t), h0r(T-1-t), h0f(T-1-t), h0r(t)] (H each)
    wf, wr = params["w_ih_l1"], params["w_ih_l1r"]
    w1 = interleave(
        jnp.concatenate([wf[:H], z(H, 4 * H), z(H, 4 * H), wf[H:]], axis=0),
        jnp.concatenate([z(H, 4 * H), wr[H:], wr[:H], z(H, 4 * H)], axis=0))
    b1 = interleave(params["b_l1"], params["b_l1r"])
    whh1 = pack_recurrent(params["w_hh_l1"], params["w_hh_l1r"])

    # head rows (z2): [h1f(t), h1r(T-1-t), h1f(T-1-t), h1r(t)]; only blocks
    # 0 (h1f(t)) and 3 (h1r(t)) feed the per-time linear layer.
    lw = params["lin_w"]
    lin_w = jnp.concatenate([lw[:H], z(H, D_h), z(H, D_h), lw[H:]], axis=0)

    return dict(H=H, w0=w0, whh0=whh0, b0=b0, w1=w1, whh1=whh1, b1=b1,
                lin_w=lin_w, lin_b=params["lin_b"],
                fc_w=params["fc_w"], fc_b=params["fc_b"])


# ----------------------------------------------------------------------------
# Full model forward (attention=False)
# ----------------------------------------------------------------------------
def lstm_model_forward(U, umask, packed):
    del umask  # only used by the attention branch (not enabled)
    T, B, D_m = U.shape
    H = packed["H"]
    D_h = packed["lin_b"].shape[-1]

    # row t*B+b = [U[t, b] | U[T-1-t, b]] : both directions' step-s inputs live
    # in the same row block (block-diag w0 keeps them separated).
    u_cat = jnp.concatenate([U, U[::-1]], axis=-1).reshape(T * B, 2 * D_m)

    operands = [u_cat, packed["w0"], packed["whh0"], packed["b0"],
                packed["w1"], packed["whh1"], packed["b1"],
                packed["lin_w"], packed["lin_b"], packed["fc_w"], packed["fc_b"]]

    flops = (2 * T * B * (2 * D_m) * 8 * H        # layer-0 input projection
             + 2 * T * B * (4 * H) * 8 * H        # layer-1 input projection
             + 2 * 2 * T * B * (2 * H) * 8 * H    # 2 layers x T recurrent steps
             + 2 * T * B * (4 * H) * D_h          # linear head
             + 2 * T * B * D_h)                   # smax_fc
    transcendentals = 2 * T * (2 * B * 8 * H + B * 2 * H)
    bytes_accessed = sum(int(np.prod(x.shape)) * 4 for x in operands) + T * B * 4

    kernel = functools.partial(_lstm_model_kernel, T=T, B=B, H=H)
    out = pl.pallas_call(
        kernel,
        out_shape=jax.ShapeDtypeStruct((1, T * B), jnp.float32),
        in_specs=[pl.BlockSpec(memory_space=pltpu.MemorySpace.VMEM)
                  for _ in operands],
        out_specs=pl.BlockSpec(memory_space=pltpu.MemorySpace.VMEM),
        cost_estimate=pl.CostEstimate(flops=flops,
                                      transcendentals=transcendentals,
                                      bytes_accessed=bytes_accessed),
    )(*operands)

    log_prob = out.reshape(T, B, 1)
    alpha, alpha_f, alpha_b = [], [], []
    return log_prob, alpha, alpha_f, alpha_b


# ----------------------------------------------------------------------------
# Pure-JAX reference (for correctness check)
# ----------------------------------------------------------------------------
def _lstm_layer_ref(x, w_ih, w_hh, b, *, reverse=False):
    T, B, _ = x.shape
    H = w_hh.shape[0]
    xs = x[::-1] if reverse else x

    def step(carry, xt):
        h, c = carry
        gates = xt @ w_ih + h @ w_hh + b
        i = jax.nn.sigmoid(gates[:, :H])
        f = jax.nn.sigmoid(gates[:, H:2 * H])
        g = jnp.tanh(gates[:, 2 * H:3 * H])
        o = jax.nn.sigmoid(gates[:, 3 * H:])
        c = f * c + i * g
        h = o * jnp.tanh(c)
        return (h, c), h

    init = (jnp.zeros((B, H), jnp.float32), jnp.zeros((B, H), jnp.float32))
    _, hs = jax.lax.scan(step, init, xs)
    return hs[::-1] if reverse else hs


def _forward_ref(U, params):
    f0 = _lstm_layer_ref(U, params["w_ih_l0"], params["w_hh_l0"], params["b_l0"])
    r0 = _lstm_layer_ref(U, params["w_ih_l0r"], params["w_hh_l0r"], params["b_l0r"],
                         reverse=True)
    x1 = jnp.concatenate([f0, r0], axis=-1)
    f1 = _lstm_layer_ref(x1, params["w_ih_l1"], params["w_hh_l1"], params["b_l1"])
    r1 = _lstm_layer_ref(x1, params["w_ih_l1r"], params["w_hh_l1r"], params["b_l1r"],
                         reverse=True)
    emotions = jnp.concatenate([f1, r1], axis=-1)
    hidden = jnp.maximum(emotions @ params["lin_w"] + params["lin_b"], 0.0)
    return hidden @ params["fc_w"].T + params["fc_b"]


# ----------------------------------------------------------------------------
# Deterministic parameter construction (PyTorch-like uniform init)
# ----------------------------------------------------------------------------
def make_params(key, D_m, D_e, D_h):
    H, H4 = D_e, 4 * D_e
    ks = iter(jax.random.split(key, 32))
    u = lambda k, shape, s: jax.random.uniform(k, shape, jnp.float32, -s, s)
    std = 1.0 / np.sqrt(H)

    def layer(in_dim):
        # pre-transposed weights: (in_dim, 4H), (H, 4H); combined bias (1, 4H)
        return dict(
            w_ih=u(next(ks), (in_dim, H4), std),
            w_hh=u(next(ks), (H, H4), std),
            b=u(next(ks), (1, H4), std) + u(next(ks), (1, H4), std),
        )

    l0, l0r = layer(D_m), layer(D_m)
    l1, l1r = layer(2 * D_e), layer(2 * D_e)
    params = {
        "w_ih_l0": l0["w_ih"], "w_hh_l0": l0["w_hh"], "b_l0": l0["b"],
        "w_ih_l0r": l0r["w_ih"], "w_hh_l0r": l0r["w_hh"], "b_l0r": l0r["b"],
        "w_ih_l1": l1["w_ih"], "w_hh_l1": l1["w_hh"], "b_l1": l1["b"],
        "w_ih_l1r": l1r["w_ih"], "w_hh_l1r": l1r["w_hh"], "b_l1r": l1r["b"],
        # linear: (2*D_e -> D_h) stored transposed; smax_fc weight stored as a
        # (1, D_h) row (PyTorch layout) for the lane-dense head projection.
        "lin_w": u(next(ks), (2 * D_e, D_h), 1.0 / np.sqrt(2 * D_e)),
        "lin_b": u(next(ks), (1, D_h), 1.0 / np.sqrt(2 * D_e)),
        "fc_w": u(next(ks), (1, D_h), 1.0 / np.sqrt(D_h)),
        "fc_b": u(next(ks), (1, 1), 1.0 / np.sqrt(D_h)),
    }
    return params


if __name__ == "__main__":
    seq_len, batch, D_m, D_e, D_h = 8, 2, 32, 32, 32

    key = jax.random.PRNGKey(0)
    k_u, k_p = jax.random.split(key)
    U = jax.random.normal(k_u, (seq_len, batch, D_m), jnp.float32)
    umask = jnp.ones((batch, seq_len), jnp.float32)
    params = make_params(k_p, D_m, D_e, D_h)
    packed = pack_params(params, D_m, D_e, D_h)   # one-time weight repack

    log_prob, alpha, alpha_f, alpha_b = lstm_model_forward(U, umask, packed)
    log_prob = jax.block_until_ready(log_prob)

    ref = _forward_ref(U, params)
    np.testing.assert_allclose(np.asarray(log_prob), np.asarray(ref),
                               rtol=1e-4, atol=1e-4)
    assert log_prob.shape == (seq_len, batch, 1)
    print("KERNEL_OK")
</pallas_src>

<mosaic_0001>
module attributes {stable_mosaic.version = 11 : i64} {
  func.func @_lstm_model_kernel(%arg0: memref<16x64xf32, #tpu.memory_space<vmem>>, %arg1: memref<64x256xf32, #tpu.memory_space<vmem>>, %arg2: memref<64x256xf32, #tpu.memory_space<vmem>>, %arg3: memref<1x256xf32, #tpu.memory_space<vmem>>, %arg4: memref<128x256xf32, #tpu.memory_space<vmem>>, %arg5: memref<64x256xf32, #tpu.memory_space<vmem>>, %arg6: memref<1x256xf32, #tpu.memory_space<vmem>>, %arg7: memref<128x32xf32, #tpu.memory_space<vmem>>, %arg8: memref<1x32xf32, #tpu.memory_space<vmem>>, %arg9: memref<1x32xf32, #tpu.memory_space<vmem>>, %arg10: memref<1x1xf32, #tpu.memory_space<vmem>>, %arg11: memref<1x16xf32, #tpu.memory_space<vmem>>) attributes {dimension_semantics = [], scalar_prefetch = 0 : i64, scratch_operands = 0 : i64, tpu.core_type = #tpu.core_type<tc>} {
    %c0 = arith.constant 0 : index
    %c0_0 = arith.constant 0 : index
    %0 = vector.load %arg0[%c0, %c0_0] : memref<16x64xf32, #tpu.memory_space<vmem>>, vector<16x64xf32>
    %c0_1 = arith.constant 0 : index
    %c0_2 = arith.constant 0 : index
    %1 = vector.load %arg1[%c0_1, %c0_2] : memref<64x256xf32, #tpu.memory_space<vmem>>, vector<64x256xf32>
    %cst = arith.constant dense<0.000000e+00> : vector<16x256xf32>
    %2 = tpu.matmul %0, %1, %cst {dimension_numbers = #tpu.dot_dimension_numbers<[1], [0], [0], [1], [0, 0, 1, 1], [], []>} : vector<16x64xf32>, vector<64x256xf32>, vector<16x256xf32> -> vector<16x256xf32>
    %c0_3 = arith.constant 0 : index
    %c0_4 = arith.constant 0 : index
    %3 = vector.load %arg3[%c0_3, %c0_4] : memref<1x256xf32, #tpu.memory_space<vmem>>, vector<1x256xf32>
    %4 = vector.broadcast %3 : vector<1x256xf32> to vector<16x256xf32>
    %5 = arith.addf %2, %4 : vector<16x256xf32>
    %c0_5 = arith.constant 0 : index
    %c0_6 = arith.constant 0 : index
    %6 = vector.load %arg2[%c0_5, %c0_6] : memref<64x256xf32, #tpu.memory_space<vmem>>, vector<64x256xf32>
    %cst_7 = arith.constant 0.000000e+00 : f32
    %7 = vector.broadcast %cst_7 : f32 to vector<2x64xf32>
    %cst_8 = arith.constant 0.000000e+00 : f32
    %8 = vector.broadcast %cst_8 : f32 to vector<2x64xf32>
    %9 = vector.extract_strided_slice %5 {offsets = [0, 0], sizes = [2, 256], strides = [1, 1]} : vector<16x256xf32> to vector<2x256xf32>
    %cst_9 = arith.constant dense<0.000000e+00> : vector<2x256xf32>
    %10 = tpu.matmul %7, %6, %cst_9 {dimension_numbers = #tpu.dot_dimension_numbers<[1], [0], [0], [1], [0, 0, 1, 1], [], []>} : vector<2x64xf32>, vector<64x256xf32>, vector<2x256xf32> -> vector<2x256xf32>
    %11 = arith.addf %9, %10 : vector<2x256xf32>
    %12 = arith.negf %11 : vector<2x256xf32>
    %13 = math.exp %12 : vector<2x256xf32>
    %cst_10 = arith.constant 1.000000e+00 : f32
    %14 = vector.broadcast %cst_10 : f32 to vector<2x256xf32>
    %15 = arith.addf %14, %13 : vector<2x256xf32>
    %16 = arith.divf %14, %15 : vector<2x256xf32>
    %17 = math.tanh %11 : vector<2x256xf32>
    %18 = vector.extract_strided_slice %16 {offsets = [0, 0], sizes = [2, 64], strides = [1, 1]} : vector<2x256xf32> to vector<2x64xf32>
    %19 = vector.extract_strided_slice %16 {offsets = [0, 64], sizes = [2, 64], strides = [1, 1]} : vector<2x256xf32> to vector<2x64xf32>
    %20 = vector.extract_strided_slice %17 {offsets = [0, 128], sizes = [2, 64], strides = [1, 1]} : vector<2x256xf32> to vector<2x64xf32>
    %21 = vector.extract_strided_slice %16 {offsets = [0, 192], sizes = [2, 64], strides = [1, 1]} : vector<2x256xf32> to vector<2x64xf32>
    %22 = arith.mulf %19, %8 : vector<2x64xf32>
    %23 = arith.mulf %18, %20 : vector<2x64xf32>
    %24 = arith.addf %22, %23 : vector<2x64xf32>
    %25 = math.tanh %24 : vector<2x64xf32>
    %26 = arith.mulf %21, %25 : vector<2x64xf32>
    %27 = vector.extract_strided_slice %5 {offsets = [2, 0], sizes = [2, 256], strides = [1, 1]} : vector<16x256xf32> to vector<2x256xf32>
    %cst_11 = arith.constant dense<0.000000e+00> : vector<2x256xf32>
    %28 = tpu.matmul %26, %6, %cst_11 {dimension_numbers = #tpu.dot_dimension_numbers<[1], [0], [0], [1], [0, 0, 1, 1], [], []>} : vector<2x64xf32>, vector<64x256xf32>, vector<2x256xf32> -> vector<2x256xf32>
    %29 = arith.addf %27, %28 : vector<2x256xf32>
    %30 = arith.negf %29 : vector<2x256xf32>
    %31 = math.exp %30 : vector<2x256xf32>
    %cst_12 = arith.constant 1.000000e+00 : f32
    %32 = vector.broadcast %cst_12 : f32 to vector<2x256xf32>
    %33 = arith.addf %32, %31 : vector<2x256xf32>
    %34 = arith.divf %32, %33 : vector<2x256xf32>
    %35 = math.tanh %29 : vector<2x256xf32>
    %36 = vector.extract_strided_slice %34 {offsets = [0, 0], sizes = [2, 64], strides = [1, 1]} : vector<2x256xf32> to vector<2x64xf32>
    %37 = vector.extract_strided_slice %34 {offsets = [0, 64], sizes = [2, 64], strides = [1, 1]} : vector<2x256xf32> to vector<2x64xf32>
    %38 = vector.extract_strided_slice %35 {offsets = [0, 128], sizes = [2, 64], strides = [1, 1]} : vector<2x256xf32> to vector<2x64xf32>
    %39 = vector.extract_strided_slice %34 {offsets = [0, 192], sizes = [2, 64], strides = [1, 1]} : vector<2x256xf32> to vector<2x64xf32>
    %40 = arith.mulf %37, %24 : vector<2x64xf32>
    %41 = arith.mulf %36, %38 : vector<2x64xf32>
    %42 = arith.addf %40, %41 : vector<2x64xf32>
    %43 = math.tanh %42 : vector<2x64xf32>
    %44 = arith.mulf %39, %43 : vector<2x64xf32>
    %45 = vector.extract_strided_slice %5 {offsets = [4, 0], sizes = [2, 256], strides = [1, 1]} : vector<16x256xf32> to vector<2x256xf32>
    %cst_13 = arith.constant dense<0.000000e+00> : vector<2x256xf32>
    %46 = tpu.matmul %44, %6, %cst_13 {dimension_numbers = #tpu.dot_dimension_numbers<[1], [0], [0], [1], [0, 0, 1, 1], [], []>} : vector<2x64xf32>, vector<64x256xf32>, vector<2x256xf32> -> vector<2x256xf32>
    %47 = arith.addf %45, %46 : vector<2x256xf32>
    %48 = arith.negf %47 : vector<2x256xf32>
    %49 = math.exp %48 : vector<2x256xf32>
    %cst_14 = arith.constant 1.000000e+00 : f32
    %50 = vector.broadcast %cst_14 : f32 to vector<2x256xf32>
    %51 = arith.addf %50, %49 : vector<2x256xf32>
    %52 = arith.divf %50, %51 : vector<2x256xf32>
    %53 = math.tanh %47 : vector<2x256xf32>
    %54 = vector.extract_strided_slice %52 {offsets = [0, 0], sizes = [2, 64], strides = [1, 1]} : vector<2x256xf32> to vector<2x64xf32>
    %55 = vector.extract_strided_slice %52 {offsets = [0, 64], sizes = [2, 64], strides = [1, 1]} : vector<2x256xf32> to vector<2x64xf32>
    %56 = vector.extract_strided_slice %53 {offsets = [0, 128], sizes = [2, 64], strides = [1, 1]} : vector<2x256xf32> to vector<2x64xf32>
    %57 = vector.extract_strided_slice %52 {offsets = [0, 192], sizes = [2, 64], strides = [1, 1]} : vector<2x256xf32> to vector<2x64xf32>
    %58 = arith.mulf %55, %42 : vector<2x64xf32>
    %59 = arith.mulf %54, %56 : vector<2x64xf32>
    %60 = arith.addf %58, %59 : vector<2x64xf32>
    %61 = math.tanh %60 : vector<2x64xf32>
    %62 = arith.mulf %57, %61 : vector<2x64xf32>
    %63 = vector.extract_strided_slice %5 {offsets = [6, 0], sizes = [2, 256], strides = [1, 1]} : vector<16x256xf32> to vector<2x256xf32>
    %cst_15 = arith.constant dense<0.000000e+00> : vector<2x256xf32>
    %64 = tpu.matmul %62, %6, %cst_15 {dimension_numbers = #tpu.dot_dimension_numbers<[1], [0], [0], [1], [0, 0, 1, 1], [], []>} : vector<2x64xf32>, vector<64x256xf32>, vector<2x256xf32> -> vector<2x256xf32>
    %65 = arith.addf %63, %64 : vector<2x256xf32>
    %66 = arith.negf %65 : vector<2x256xf32>
    %67 = math.exp %66 : vector<2x256xf32>
    %cst_16 = arith.constant 1.000000e+00 : f32
    %68 = vector.broadcast %cst_16 : f32 to vector<2x256xf32>
    %69 = arith.addf %68, %67 : vector<2x256xf32>
    %70 = arith.divf %68, %69 : vector<2x256xf32>
    %71 = math.tanh %65 : vector<2x256xf32>
    %72 = vector.extract_strided_slice %70 {offsets = [0, 0], sizes = [2, 64], strides = [1, 1]} : vector<2x256xf32> to vector<2x64xf32>
    %73 = vector.extract_strided_slice %70 {offsets = [0, 64], sizes = [2, 64], strides = [1, 1]} : vector<2x256xf32> to vector<2x64xf32>
    %74 = vector.extract_strided_slice %71 {offsets = [0, 128], sizes = [2, 64], strides = [1, 1]} : vector<2x256xf32> to vector<2x64xf32>
    %75 = vector.extract_strided_slice %70 {offsets = [0, 192], sizes = [2, 64], strides = [1, 1]} : vector<2x256xf32> to vector<2x64xf32>
    %76 = arith.mulf %73, %60 : vector<2x64xf32>
    %77 = arith.mulf %72, %74 : vector<2x64xf32>
    %78 = arith.addf %76, %77 : vector<2x64xf32>
    %79 = math.tanh %78 : vector<2x64xf32>
    %80 = arith.mulf %75, %79 : vector<2x64xf32>
    %81 = vector.extract_strided_slice %5 {offsets = [8, 0], sizes = [2, 256], strides = [1, 1]} : vector<16x256xf32> to vector<2x256xf32>
    %cst_17 = arith.constant dense<0.000000e+00> : vector<2x256xf32>
    %82 = tpu.matmul %80, %6, %cst_17 {dimension_numbers = #tpu.dot_dimension_numbers<[1], [0], [0], [1], [0, 0, 1, 1], [], []>} : vector<2x64xf32>, vector<64x256xf32>, vector<2x256xf32> -> vector<2x256xf32>
    %83 = arith.addf %81, %82 : vector<2x256xf32>
    %84 = arith.negf %83 : vector<2x256xf32>
    %85 = math.exp %84 : vector<2x256xf32>
    %cst_18 = arith.constant 1.000000e+00 : f32
    %86 = vector.broadcast %cst_18 : f32 to vector<2x256xf32>
    %87 = arith.addf %86, %85 : vector<2x256xf32>
    %88 = arith.divf %86, %87 : vector<2x256xf32>
    %89 = math.tanh %83 : vector<2x256xf32>
    %90 = vector.extract_strided_slice %88 {offsets = [0, 0], sizes = [2, 64], strides = [1, 1]} : vector<2x256xf32> to vector<2x64xf32>
    %91 = vector.extract_strided_slice %88 {offsets = [0, 64], sizes = [2, 64], strides = [1, 1]} : vector<2x256xf32> to vector<2x64xf32>
    %92 = vector.extract_strided_slice %89 {offsets = [0, 128], sizes = [2, 64], strides = [1, 1]} : vector<2x256xf32> to vector<2x64xf32>
    %93 = vector.extract_strided_slice %88 {offsets = [0, 192], sizes = [2, 64], strides = [1, 1]} : vector<2x256xf32> to vector<2x64xf32>
    %94 = arith.mulf %91, %78 : vector<2x64xf32>
    %95 = arith.mulf %90, %92 : vector<2x64xf32>
    %96 = arith.addf %94, %95 : vector<2x64xf32>
    %97 = math.tanh %96 : vector<2x64xf32>
    %98 = arith.mulf %93, %97 : vector<2x64xf32>
    %99 = vector.extract_strided_slice %5 {offsets = [10, 0], sizes = [2, 256], strides = [1, 1]} : vector<16x256xf32> to vector<2x256xf32>
    %cst_19 = arith.constant dense<0.000000e+00> : vector<2x256xf32>
    %100 = tpu.matmul %98, %6, %cst_19 {dimension_numbers = #tpu.dot_dimension_numbers<[1], [0], [0], [1], [0, 0, 1, 1], [], []>} : vector<2x64xf32>, vector<64x256xf32>, vector<2x256xf32> -> vector<2x256xf32>
    %101 = arith.addf %99, %100 : vector<2x256xf32>
    %102 = arith.negf %101 : vector<2x256xf32>
    %103 = math.exp %102 : vector<2x256xf32>
    %cst_20 = arith.constant 1.000000e+00 : f32
    %104 = vector.broadcast %cst_20 : f32 to vector<2x256xf32>
    %105 = arith.addf %104, %103 : vector<2x256xf32>
    %106 = arith.divf %104, %105 : vector<2x256xf32>
    %107 = math.tanh %101 : vector<2x256xf32>
    %108 = vector.extract_strided_slice %106 {offsets = [0, 0], sizes = [2, 64], strides = [1, 1]} : vector<2x256xf32> to vector<2x64xf32>
    %109 = vector.extract_strided_slice %106 {offsets = [0, 64], sizes = [2, 64], strides = [1, 1]} : vector<2x256xf32> to vector<2x64xf32>
    %110 = vector.extract_strided_slice %107 {offsets = [0, 128], sizes = [2, 64], strides = [1, 1]} : vector<2x256xf32> to vector<2x64xf32>
    %111 = vector.extract_strided_slice %106 {offsets = [0, 192], sizes = [2, 64], strides = [1, 1]} : vector<2x256xf32> to vector<2x64xf32>
    %112 = arith.mulf %109, %96 : vector<2x64xf32>
    %113 = arith.mulf %108, %110 : vector<2x64xf32>
    %114 = arith.addf %112, %113 : vector<2x64xf32>
    %115 = math.tanh %114 : vector<2x64xf32>
    %116 = arith.mulf %111, %115 : vector<2x64xf32>
    %117 = vector.extract_strided_slice %5 {offsets = [12, 0], sizes = [2, 256], strides = [1, 1]} : vector<16x256xf32> to vector<2x256xf32>
    %cst_21 = arith.constant dense<0.000000e+00> : vector<2x256xf32>
    %118 = tpu.matmul %116, %6, %cst_21 {dimension_numbers = #tpu.dot_dimension_numbers<[1], [0], [0], [1], [0, 0, 1, 1], [], []>} : vector<2x64xf32>, vector<64x256xf32>, vector<2x256xf32> -> vector<2x256xf32>
    %119 = arith.addf %117, %118 : vector<2x256xf32>
    %120 = arith.negf %119 : vector<2x256xf32>
    %121 = math.exp %120 : vector<2x256xf32>
    %cst_22 = arith.constant 1.000000e+00 : f32
    %122 = vector.broadcast %cst_22 : f32 to vector<2x256xf32>
    %123 = arith.addf %122, %121 : vector<2x256xf32>
    %124 = arith.divf %122, %123 : vector<2x256xf32>
    %125 = math.tanh %119 : vector<2x256xf32>
    %126 = vector.extract_strided_slice %124 {offsets = [0, 0], sizes = [2, 64], strides = [1, 1]} : vector<2x256xf32> to vector<2x64xf32>
    %127 = vector.extract_strided_slice %124 {offsets = [0, 64], sizes = [2, 64], strides = [1, 1]} : vector<2x256xf32> to vector<2x64xf32>
    %128 = vector.extract_strided_slice %125 {offsets = [0, 128], sizes = [2, 64], strides = [1, 1]} : vector<2x256xf32> to vector<2x64xf32>
    %129 = vector.extract_strided_slice %124 {offsets = [0, 192], sizes = [2, 64], strides = [1, 1]} : vector<2x256xf32> to vector<2x64xf32>
    %130 = arith.mulf %127, %114 : vector<2x64xf32>
    %131 = arith.mulf %126, %128 : vector<2x64xf32>
    %132 = arith.addf %130, %131 : vector<2x64xf32>
    %133 = math.tanh %132 : vector<2x64xf32>
    %134 = arith.mulf %129, %133 : vector<2x64xf32>
    %135 = vector.extract_strided_slice %5 {offsets = [14, 0], sizes = [2, 256], strides = [1, 1]} : vector<16x256xf32> to vector<2x256xf32>
    %cst_23 = arith.constant dense<0.000000e+00> : vector<2x256xf32>
    %136 = tpu.matmul %134, %6, %cst_23 {dimension_numbers = #tpu.dot_dimension_numbers<[1], [0], [0], [1], [0, 0, 1, 1], [], []>} : vector<2x64xf32>, vector<64x256xf32>, vector<2x256xf32> -> vector<2x256xf32>
    %137 = arith.addf %135, %136 : vector<2x256xf32>
    %138 = arith.negf %137 : vector<2x256xf32>
    %139 = math.exp %138 : vector<2x256xf32>
    %cst_24 = arith.constant 1.000000e+00 : f32
    %140 = vector.broadcast %cst_24 : f32 to vector<2x256xf32>
    %141 = arith.addf %140, %139 : vector<2x256xf32>
    %142 = arith.divf %140, %141 : vector<2x256xf32>
    %143 = math.tanh %137 : vector<2x256xf32>
    %144 = vector.extract_strided_slice %142 {offsets = [0, 0], sizes = [2, 64], strides = [1, 1]} : vector<2x256xf32> to vector<2x64xf32>
    %145 = vector.extract_strided_slice %142 {offsets = [0, 64], sizes = [2, 64], strides = [1, 1]} : vector<2x256xf32> to vector<2x64xf32>
    %146 = vector.extract_strided_slice %143 {offsets = [0, 128], sizes = [2, 64], strides = [1, 1]} : vector<2x256xf32> to vector<2x64xf32>
    %147 = vector.extract_strided_slice %142 {offsets = [0, 192], sizes = [2, 64], strides = [1, 1]} : vector<2x256xf32> to vector<2x64xf32>
    %148 = arith.mulf %145, %132 : vector<2x64xf32>
    %149 = arith.mulf %144, %146 : vector<2x64xf32>
    %150 = arith.addf %148, %149 : vector<2x64xf32>
    %151 = math.tanh %150 : vector<2x64xf32>
    %152 = arith.mulf %147, %151 : vector<2x64xf32>
    %153 = tpu.concatenate %26, %44, %62, %80, %98, %116, %134, %152 in 0 : vector<2x64xf32>, vector<2x64xf32>, vector<2x64xf32>, vector<2x64xf32>, vector<2x64xf32>, vector<2x64xf32>, vector<2x64xf32>, vector<2x64xf32> -> vector<16x64xf32>
    %154 = tpu.concatenate %152, %134, %116, %98, %80, %62, %44, %26 in 0 : vector<2x64xf32>, vector<2x64xf32>, vector<2x64xf32>, vector<2x64xf32>, vector<2x64xf32>, vector<2x64xf32>, vector<2x64xf32>, vector<2x64xf32> -> vector<16x64xf32>
    %155 = tpu.concatenate %153, %154 in 1 : vector<16x64xf32>, vector<16x64xf32> -> vector<16x128xf32>
    %c0_25 = arith.constant 0 : index
    %c0_26 = arith.constant 0 : index
    %156 = vector.load %arg4[%c0_25, %c0_26] : memref<128x256xf32, #tpu.memory_space<vmem>>, vector<128x256xf32>
    %cst_27 = arith.constant dense<0.000000e+00> : vector<16x256xf32>
    %157 = tpu.matmul %155, %156, %cst_27 {dimension_numbers = #tpu.dot_dimension_numbers<[1], [0], [0], [1], [0, 0, 1, 1], [], []>} : vector<16x128xf32>, vector<128x256xf32>, vector<16x256xf32> -> vector<16x256xf32>
    %c0_28 = arith.constant 0 : index
    %c0_29 = arith.constant 0 : index
    %158 = vector.load %arg6[%c0_28, %c0_29] : memref<1x256xf32, #tpu.memory_space<vmem>>, vector<1x256xf32>
    %159 = vector.broadcast %158 : vector<1x256xf32> to vector<16x256xf32>
    %160 = arith.addf %157, %159 : vector<16x256xf32>
    %c0_30 = arith.constant 0 : index
    %c0_31 = arith.constant 0 : index
    %161 = vector.load %arg5[%c0_30, %c0_31] : memref<64x256xf32, #tpu.memory_space<vmem>>, vector<64x256xf32>
    %cst_32 = arith.constant 0.000000e+00 : f32
    %162 = vector.broadcast %cst_32 : f32 to vector<2x64xf32>
    %cst_33 = arith.constant 0.000000e+00 : f32
    %163 = vector.broadcast %cst_33 : f32 to vector<2x64xf32>
    %164 = vector.extract_strided_slice %160 {offsets = [0, 0], sizes = [2, 256], strides = [1, 1]} : vector<16x256xf32> to vector<2x256xf32>
    %cst_34 = arith.constant dense<0.000000e+00> : vector<2x256xf32>
    %165 = tpu.matmul %162, %161, %cst_34 {dimension_numbers = #tpu.dot_dimension_numbers<[1], [0], [0], [1], [0, 0, 1, 1], [], []>} : vector<2x64xf32>, vector<64x256xf32>, vector<2x256xf32> -> vector<2x256xf32>
    %166 = arith.addf %164, %165 : vector<2x256xf32>
    %167 = arith.negf %166 : vector<2x256xf32>
    %168 = math.exp %167 : vector<2x256xf32>
    %cst_35 = arith.constant 1.000000e+00 : f32
    %169 = vector.broadcast %cst_35 : f32 to vector<2x256xf32>
    %170 = arith.addf %169, %168 : vector<2x256xf32>
    %171 = arith.divf %169, %170 : vector<2x256xf32>
    %172 = math.tanh %166 : vector<2x256xf32>
    %173 = vector.extract_strided_slice %171 {offsets = [0, 0], sizes = [2, 64], strides = [1, 1]} : vector<2x256xf32> to vector<2x64xf32>
    %174 = vector.extract_strided_slice %171 {offsets = [0, 64], sizes = [2, 64], strides = [1, 1]} : vector<2x256xf32> to vector<2x64xf32>
    %175 = vector.extract_strided_slice %172 {offsets = [0, 128], sizes = [2, 64], strides = [1, 1]} : vector<2x256xf32> to vector<2x64xf32>
    %176 = vector.extract_strided_slice %171 {offsets = [0, 192], sizes = [2, 64], strides = [1, 1]} : vector<2x256xf32> to vector<2x64xf32>
    %177 = arith.mulf %174, %163 : vector<2x64xf32>
    %178 = arith.mulf %173, %175 : vector<2x64xf32>
    %179 = arith.addf %177, %178 : vector<2x64xf32>
    %180 = math.tanh %179 : vector<2x64xf32>
    %181 = arith.mulf %176, %180 : vector<2x64xf32>
    %182 = vector.extract_strided_slice %160 {offsets = [2, 0], sizes = [2, 256], strides = [1, 1]} : vector<16x256xf32> to vector<2x256xf32>
    %cst_36 = arith.constant dense<0.000000e+00> : vector<2x256xf32>
    %183 = tpu.matmul %181, %161, %cst_36 {dimension_numbers = #tpu.dot_dimension_numbers<[1], [0], [0], [1], [0, 0, 1, 1], [], []>} : vector<2x64xf32>, vector<64x256xf32>, vector<2x256xf32> -> vector<2x256xf32>
    %184 = arith.addf %182, %183 : vector<2x256xf32>
    %185 = arith.negf %184 : vector<2x256xf32>
    %186 = math.exp %185 : vector<2x256xf32>
    %cst_37 = arith.constant 1.000000e+00 : f32
    %187 = vector.broadcast %cst_37 : f32 to vector<2x256xf32>
    %188 = arith.addf %187, %186 : vector<2x256xf32>
    %189 = arith.divf %187, %188 : vector<2x256xf32>
    %190 = math.tanh %184 : vector<2x256xf32>
    %191 = vector.extract_strided_slice %189 {offsets = [0, 0], sizes = [2, 64], strides = [1, 1]} : vector<2x256xf32> to vector<2x64xf32>
    %192 = vector.extract_strided_slice %189 {offsets = [0, 64], sizes = [2, 64], strides = [1, 1]} : vector<2x256xf32> to vector<2x64xf32>
    %193 = vector.extract_strided_slice %190 {offsets = [0, 128], sizes = [2, 64], strides = [1, 1]} : vector<2x256xf32> to vector<2x64xf32>
    %194 = vector.extract_strided_slice %189 {offsets = [0, 192], sizes = [2, 64], strides = [1, 1]} : vector<2x256xf32> to vector<2x64xf32>
    %195 = arith.mulf %192, %179 : vector<2x64xf32>
    %196 = arith.mulf %191, %193 : vector<2x64xf32>
    %197 = arith.addf %195, %196 : vector<2x64xf32>
    %198 = math.tanh %197 : vector<2x64xf32>
    %199 = arith.mulf %194, %198 : vector<2x64xf32>
    %200 = vector.extract_strided_slice %160 {offsets = [4, 0], sizes = [2, 256], strides = [1, 1]} : vector<16x256xf32> to vector<2x256xf32>
    %cst_38 = arith.constant dense<0.000000e+00> : vector<2x256xf32>
    %201 = tpu.matmul %199, %161, %cst_38 {dimension_numbers = #tpu.dot_dimension_numbers<[1], [0], [0], [1], [0, 0, 1, 1], [], []>} : vector<2x64xf32>, vector<64x256xf32>, vector<2x256xf32> -> vector<2x256xf32>
    %202 = arith.addf %200, %201 : vector<2x256xf32>
    %203 = arith.negf %202 : vector<2x256xf32>
    %204 = math.exp %203 : vector<2x256xf32>
    %cst_39 = arith.constant 1.000000e+00 : f32
    %205 = vector.broadcast %cst_39 : f32 to vector<2x256xf32>
    %206 = arith.addf %205, %204 : vector<2x256xf32>
    %207 = arith.divf %205, %206 : vector<2x256xf32>
    %208 = math.tanh %202 : vector<2x256xf32>
    %209 = vector.extract_strided_slice %207 {offsets = [0, 0], sizes = [2, 64], strides = [1, 1]} : vector<2x256xf32> to vector<2x64xf32>
    %210 = vector.extract_strided_slice %207 {offsets = [0, 64], sizes = [2, 64], strides = [1, 1]} : vector<2x256xf32> to vector<2x64xf32>
    %211 = vector.extract_strided_slice %208 {offsets = [0, 128], sizes = [2, 64], strides = [1, 1]} : vector<2x256xf32> to vector<2x64xf32>
    %212 = vector.extract_strided_slice %207 {offsets = [0, 192], sizes = [2, 64], strides = [1, 1]} : vector<2x256xf32> to vector<2x64xf32>
    %213 = arith.mulf %210, %197 : vector<2x64xf32>
    %214 = arith.mulf %209, %211 : vector<2x64xf32>
    %215 = arith.addf %213, %214 : vector<2x64xf32>
    %216 = math.tanh %215 : vector<2x64xf32>
    %217 = arith.mulf %212, %216 : vector<2x64xf32>
    %218 = vector.extract_strided_slice %160 {offsets = [6, 0], sizes = [2, 256], strides = [1, 1]} : vector<16x256xf32> to vector<2x256xf32>
    %cst_40 = arith.constant dense<0.000000e+00> : vector<2x256xf32>
    %219 = tpu.matmul %217, %161, %cst_40 {dimension_numbers = #tpu.dot_dimension_numbers<[1], [0], [0], [1], [0, 0, 1, 1], [], []>} : vector<2x64xf32>, vector<64x256xf32>, vector<2x256xf32> -> vector<2x256xf32>
    %220 = arith.addf %218, %219 : vector<2x256xf32>
    %221 = arith.negf %220 : vector<2x256xf32>
    %222 = math.exp %221 : vector<2x256xf32>
    %cst_41 = arith.constant 1.000000e+00 : f32
    %223 = vector.broadcast %cst_41 : f32 to vector<2x256xf32>
    %224 = arith.addf %223, %222 : vector<2x256xf32>
    %225 = arith.divf %223, %224 : vector<2x256xf32>
    %226 = math.tanh %220 : vector<2x256xf32>
    %227 = vector.extract_strided_slice %225 {offsets = [0, 0], sizes = [2, 64], strides = [1, 1]} : vector<2x256xf32> to vector<2x64xf32>
    %228 = vector.extract_strided_slice %225 {offsets = [0, 64], sizes = [2, 64], strides = [1, 1]} : vector<2x256xf32> to vector<2x64xf32>
    %229 = vector.extract_strided_slice %226 {offsets = [0, 128], sizes = [2, 64], strides = [1, 1]} : vector<2x256xf32> to vector<2x64xf32>
    %230 = vector.extract_strided_slice %225 {offsets = [0, 192], sizes = [2, 64], strides = [1, 1]} : vector<2x256xf32> to vector<2x64xf32>
    %231 = arith.mulf %228, %215 : vector<2x64xf32>
    %232 = arith.mulf %227, %229 : vector<2x64xf32>
    %233 = arith.addf %231, %232 : vector<2x64xf32>
    %234 = math.tanh %233 : vector<2x64xf32>
    %235 = arith.mulf %230, %234 : vector<2x64xf32>
    %236 = vector.extract_strided_slice %160 {offsets = [8, 0], sizes = [2, 256], strides = [1, 1]} : vector<16x256xf32> to vector<2x256xf32>
    %cst_42 = arith.constant dense<0.000000e+00> : vector<2x256xf32>
    %237 = tpu.matmul %235, %161, %cst_42 {dimension_numbers = #tpu.dot_dimension_numbers<[1], [0], [0], [1], [0, 0, 1, 1], [], []>} : vector<2x64xf32>, vector<64x256xf32>, vector<2x256xf32> -> vector<2x256xf32>
    %238 = arith.addf %236, %237 : vector<2x256xf32>
    %239 = arith.negf %238 : vector<2x256xf32>
    %240 = math.exp %239 : vector<2x256xf32>
    %cst_43 = arith.constant 1.000000e+00 : f32
    %241 = vector.broadcast %cst_43 : f32 to vector<2x256xf32>
    %242 = arith.addf %241, %240 : vector<2x256xf32>
    %243 = arith.divf %241, %242 : vector<2x256xf32>
    %244 = math.tanh %238 : vector<2x256xf32>
    %245 = vector.extract_strided_slice %243 {offsets = [0, 0], sizes = [2, 64], strides = [1, 1]} : vector<2x256xf32> to vector<2x64xf32>
    %246 = vector.extract_strided_slice %243 {offsets = [0, 64], sizes = [2, 64], strides = [1, 1]} : vector<2x256xf32> to vector<2x64xf32>
    %247 = vector.extract_strided_slice %244 {offsets = [0, 128], sizes = [2, 64], strides = [1, 1]} : vector<2x256xf32> to vector<2x64xf32>
    %248 = vector.extract_strided_slice %243 {offsets = [0, 192], sizes = [2, 64], strides = [1, 1]} : vector<2x256xf32> to vector<2x64xf32>
    %249 = arith.mulf %246, %233 : vector<2x64xf32>
    %250 = arith.mulf %245, %247 : vector<2x64xf32>
    %251 = arith.addf %249, %250 : vector<2x64xf32>
    %252 = math.tanh %251 : vector<2x64xf32>
    %253 = arith.mulf %248, %252 : vector<2x64xf32>
    %254 = vector.extract_strided_slice %160 {offsets = [10, 0], sizes = [2, 256], strides = [1, 1]} : vector<16x256xf32> to vector<2x256xf32>
    %cst_44 = arith.constant dense<0.000000e+00> : vector<2x256xf32>
    %255 = tpu.matmul %253, %161, %cst_44 {dimension_numbers = #tpu.dot_dimension_numbers<[1], [0], [0], [1], [0, 0, 1, 1], [], []>} : vector<2x64xf32>, vector<64x256xf32>, vector<2x256xf32> -> vector<2x256xf32>
    %256 = arith.addf %254, %255 : vector<2x256xf32>
    %257 = arith.negf %256 : vector<2x256xf32>
    %258 = math.exp %257 : vector<2x256xf32>
    %cst_45 = arith.constant 1.000000e+00 : f32
    %259 = vector.broadcast %cst_45 : f32 to vector<2x256xf32>
    %260 = arith.addf %259, %258 : vector<2x256xf32>
    %261 = arith.divf %259, %260 : vector<2x256xf32>
    %262 = math.tanh %256 : vector<2x256xf32>
    %263 = vector.extract_strided_slice %261 {offsets = [0, 0], sizes = [2, 64], strides = [1, 1]} : vector<2x256xf32> to vector<2x64xf32>
    %264 = vector.extract_strided_slice %261 {offsets = [0, 64], sizes = [2, 64], strides = [1, 1]} : vector<2x256xf32> to vector<2x64xf32>
    %265 = vector.extract_strided_slice %262 {offsets = [0, 128], sizes = [2, 64], strides = [1, 1]} : vector<2x256xf32> to vector<2x64xf32>
    %266 = vector.extract_strided_slice %261 {offsets = [0, 192], sizes = [2, 64], strides = [1, 1]} : vector<2x256xf32> to vector<2x64xf32>
    %267 = arith.mulf %264, %251 : vector<2x64xf32>
    %268 = arith.mulf %263, %265 : vector<2x64xf32>
    %269 = arith.addf %267, %268 : vector<2x64xf32>
    %270 = math.tanh %269 : vector<2x64xf32>
    %271 = arith.mulf %266, %270 : vector<2x64xf32>
    %272 = vector.extract_strided_slice %160 {offsets = [12, 0], sizes = [2, 256], strides = [1, 1]} : vector<16x256xf32> to vector<2x256xf32>
    %cst_46 = arith.constant dense<0.000000e+00> : vector<2x256xf32>
    %273 = tpu.matmul %271, %161, %cst_46 {dimension_numbers = #tpu.dot_dimension_numbers<[1], [0], [0], [1], [0, 0, 1, 1], [], []>} : vector<2x64xf32>, vector<64x256xf32>, vector<2x256xf32> -> vector<2x256xf32>
    %274 = arith.addf %272, %273 : vector<2x256xf32>
    %275 = arith.negf %274 : vector<2x256xf32>
    %276 = math.exp %275 : vector<2x256xf32>
    %cst_47 = arith.constant 1.000000e+00 : f32
    %277 = vector.broadcast %cst_47 : f32 to vector<2x256xf32>
    %278 = arith.addf %277, %276 : vector<2x256xf32>
    %279 = arith.divf %277, %278 : vector<2x256xf32>
    %280 = math.tanh %274 : vector<2x256xf32>
    %281 = vector.extract_strided_slice %279 {offsets = [0, 0], sizes = [2, 64], strides = [1, 1]} : vector<2x256xf32> to vector<2x64xf32>
    %282 = vector.extract_strided_slice %279 {offsets = [0, 64], sizes = [2, 64], strides = [1, 1]} : vector<2x256xf32> to vector<2x64xf32>
    %283 = vector.extract_strided_slice %280 {offsets = [0, 128], sizes = [2, 64], strides = [1, 1]} : vector<2x256xf32> to vector<2x64xf32>
    %284 = vector.extract_strided_slice %279 {offsets = [0, 192], sizes = [2, 64], strides = [1, 1]} : vector<2x256xf32> to vector<2x64xf32>
    %285 = arith.mulf %282, %269 : vector<2x64xf32>
    %286 = arith.mulf %281, %283 : vector<2x64xf32>
    %287 = arith.addf %285, %286 : vector<2x64xf32>
    %288 = math.tanh %287 : vector<2x64xf32>
    %289 = arith.mulf %284, %288 : vector<2x64xf32>
    %290 = vector.extract_strided_slice %160 {offsets = [14, 0], sizes = [2, 256], strides = [1, 1]} : vector<16x256xf32> to vector<2x256xf32>
    %cst_48 = arith.constant dense<0.000000e+00> : vector<2x256xf32>
    %291 = tpu.matmul %289, %161, %cst_48 {dimension_numbers = #tpu.dot_dimension_numbers<[1], [0], [0], [1], [0, 0, 1, 1], [], []>} : vector<2x64xf32>, vector<64x256xf32>, vector<2x256xf32> -> vector<2x256xf32>
    %292 = arith.addf %290, %291 : vector<2x256xf32>
    %293 = arith.negf %292 : vector<2x256xf32>
    %294 = math.exp %293 : vector<2x256xf32>
    %cst_49 = arith.constant 1.000000e+00 : f32
    %295 = vector.broadcast %cst_49 : f32 to vector<2x256xf32>
    %296 = arith.addf %295, %294 : vector<2x256xf32>
    %297 = arith.divf %295, %296 : vector<2x256xf32>
    %298 = math.tanh %292 : vector<2x256xf32>
    %299 = vector.extract_strided_slice %297 {offsets = [0, 0], sizes = [2, 64], strides = [1, 1]} : vector<2x256xf32> to vector<2x64xf32>
    %300 = vector.extract_strided_slice %297 {offsets = [0, 64], sizes = [2, 64], strides = [1, 1]} : vector<2x256xf32> to vector<2x64xf32>
    %301 = vector.extract_strided_slice %298 {offsets = [0, 128], sizes = [2, 64], strides = [1, 1]} : vector<2x256xf32> to vector<2x64xf32>
    %302 = vector.extract_strided_slice %297 {offsets = [0, 192], sizes = [2, 64], strides = [1, 1]} : vector<2x256xf32> to vector<2x64xf32>
    %303 = arith.mulf %300, %287 : vector<2x64xf32>
    %304 = arith.mulf %299, %301 : vector<2x64xf32>
    %305 = arith.addf %303, %304 : vector<2x64xf32>
    %306 = math.tanh %305 : vector<2x64xf32>
    %307 = arith.mulf %302, %306 : vector<2x64xf32>
    %308 = tpu.concatenate %181, %199, %217, %235, %253, %271, %289, %307 in 0 : vector<2x64xf32>, vector<2x64xf32>, vector<2x64xf32>, vector<2x64xf32>, vector<2x64xf32>, vector<2x64xf32>, vector<2x64xf32>, vector<2x64xf32> -> vector<16x64xf32>
    %309 = tpu.concatenate %307, %289, %271, %253, %235, %217, %199, %181 in 0 : vector<2x64xf32>, vector<2x64xf32>, vector<2x64xf32>, vector<2x64xf32>, vector<2x64xf32>, vector<2x64xf32>, vector<2x64xf32>, vector<2x64xf32> -> vector<16x64xf32>
    %310 = tpu.concatenate %308, %309 in 1 : vector<16x64xf32>, vector<16x64xf32> -> vector<16x128xf32>
    %c0_50 = arith.constant 0 : index
    %c0_51 = arith.constant 0 : index
    %311 = vector.load %arg7[%c0_50, %c0_51] : memref<128x32xf32, #tpu.memory_space<vmem>>, vector<128x32xf32>
    %cst_52 = arith.constant dense<0.000000e+00> : vector<16x32xf32>
    %312 = tpu.matmul %310, %311, %cst_52 {dimension_numbers = #tpu.dot_dimension_numbers<[1], [0], [0], [1], [0, 0, 1, 1], [], []>} : vector<16x128xf32>, vector<128x32xf32>, vector<16x32xf32> -> vector<16x32xf32>
    %c0_53 = arith.constant 0 : index
    %c0_54 = arith.constant 0 : index
    %313 = vector.load %arg8[%c0_53, %c0_54] : memref<1x32xf32, #tpu.memory_space<vmem>>, vector<1x32xf32>
    %314 = vector.broadcast %313 : vector<1x32xf32> to vector<16x32xf32>
    %315 = arith.addf %312, %314 : vector<16x32xf32>
    %cst_55 = arith.constant 0.000000e+00 : f32
    %316 = vector.broadcast %cst_55 : f32 to vector<16x32xf32>
    %317 = arith.maximumf %315, %316 : vector<16x32xf32>
    %c0_56 = arith.constant 0 : index
    %c0_57 = arith.constant 0 : index
    %318 = vector.load %arg9[%c0_56, %c0_57] : memref<1x32xf32, #tpu.memory_space<vmem>>, vector<1x32xf32>
    %cst_58 = arith.constant dense<0.000000e+00> : vector<1x16xf32>
    %319 = tpu.matmul %318, %317, %cst_58 {dimension_numbers = #tpu.dot_dimension_numbers<[1], [1], [0], [0], [0, 0, 1, 0], [], []>} : vector<1x32xf32>, vector<16x32xf32>, vector<1x16xf32> -> vector<1x16xf32>
    %c0_59 = arith.constant 0 : index
    %c0_60 = arith.constant 0 : index
    %320 = vector.load %arg10[%c0_59, %c0_60] : memref<1x1xf32, #tpu.memory_space<vmem>>, vector<1x1xf32>
    %321 = vector.broadcast %320 : vector<1x1xf32> to vector<1x16xf32>
    %322 = arith.addf %319, %321 : vector<1x16xf32>
    %c0_61 = arith.constant 0 : index
    %c0_62 = arith.constant 0 : index
    %323 = vector.load %arg11[%c0_61, %c0_62] : memref<1x16xf32, #tpu.memory_space<vmem>>, vector<1x16xf32>
    tpu.vector_store %arg11[%c0_61, %c0_62], %322 {strides = array<i32>} : memref<1x16xf32, #tpu.memory_space<vmem>>, vector<1x16xf32>,
    return
  }
}

</mosaic_0001>

<llo_original>
// kernel: tpu_custom_call.1
$region0: #{tpu_custom_call.1}
  #allocation0 [shape = 'u32[]', space=smem, size = 0x4, offset = 0x4, fixed_abs, tag = 'smem constant byte address 0x4 - core index']
  #allocation1 [shape = 'u32[144,128]{1,0:T(1,128)}', space=vmem, size = 0x12000, scoped, tag = 'internal scratch']
  #allocation2 [shape = 'f32[1,1]{1,0:T(1,128)S(1)}', space=vmem, size = 0x200, scoped, tag = 'scoped memory for tpu_custom_call.1']
  %s0 = inlined_call_operand.vmem [shape: f32[16,64], index: 0, kind: input, shape index: {}]
  %s1 = inlined_call_operand.vmem [shape: f32[64,256], index: 1, kind: input, shape index: {}]
  %s2 = inlined_call_operand.hbm [shape: f32[64,256], index: 2, kind: input, shape index: {}]
  %s3 = inlined_call_operand.vmem [shape: f32[1,256], index: 3, kind: input, shape index: {}]
  %s4 = inlined_call_operand.hbm [shape: f32[128,256], index: 4, kind: input, shape index: {}]
  %s5 = inlined_call_operand.hbm [shape: f32[64,256], index: 5, kind: input, shape index: {}]
  %s6 = inlined_call_operand.vmem [shape: f32[1,256], index: 6, kind: input, shape index: {}]
  %s7 = inlined_call_operand.vmem [shape: f32[128,32], index: 7, kind: input, shape index: {}]
  %s8 = inlined_call_operand.vmem [shape: f32[1,32], index: 8, kind: input, shape index: {}]
  %s9 = inlined_call_operand.vmem [shape: f32[1,32], index: 9, kind: input, shape index: {}]
  %s10 = inlined_call_operand.<no memory space> [shape: f32[1,1], index: 10, kind: input, shape index: {}]
  %s11 = inlined_call_operand.hbm [shape: f32[1,16], index: 11, kind: output, shape index: {}]
  %s12 = sld [smem:[#allocation0]]
  $region66: #{tpu_custom_call.1} parent=0
    _
  %s14 = ssub.s32 1, %s12
  %s15 = scalar_select 0, %s14, %s12
  %v16 = vstv %s10
  %17 = vst [vmem:[#allocation2] sm:$0x1] %v16
  $region1: #{tpu_custom_call.1} parent=0
    #allocation3 [shape = 'u8[65536]{0}', space=vmem, size = 0x10000, scoped, tag = 'input window, operand 2, single buffered']
    #allocation4 [shape = 's32[1]{0}', space=sflag, size = 0x4, scoped, tag = 'scoped memory for tpu_custom_call.1']
    #allocation5 [shape = 's32[1]{0}', space=sflag, size = 0x4, scoped, tag = 'scoped memory for tpu_custom_call.1']
    #allocation6 [shape = 'u8[131072]{0}', space=vmem, size = 0x20000, scoped, tag = 'input window, operand 4, single buffered']
    #allocation7 [shape = 's32[1]{0}', space=sflag, size = 0x4, scoped, tag = 'scoped memory for tpu_custom_call.1']
    #allocation8 [shape = 'u8[65536]{0}', space=vmem, size = 0x10000, scoped, tag = 'input window, operand 5, single buffered']
    #allocation9 [shape = 'u8[512]{0}', space=vmem, size = 0x400, scoped, tag = 'output window, operand 0, single buffered']
    %18 = vsyncpa [#allocation4], 0
    %19 = vsyncpa [#allocation7], 0
    %20 = vsyncpa [#allocation5], 0
    // Predicated region
    $region2: #{tpu_custom_call.1} parent=1 // pred_check
      _
    $region3: #{tpu_custom_call.1} parent=1 // pred_check_branch
      %22 = sbr.rel (0) target = $region5
    $region4: #{tpu_custom_call.1} parent=1 // pred_region
      _
    $region5: #{tpu_custom_call.1} parent=1 // pred_fallthru
      _
    // Predicated region
    $region6: #{tpu_custom_call.1} parent=1 // pred_check
      _
    $region7: #{tpu_custom_call.1} parent=1 // pred_check_branch
      %24 = sbr.rel (0) target = $region9
    $region8: #{tpu_custom_call.1} parent=1 // pred_region
      _
    $region9: #{tpu_custom_call.1} parent=1 // pred_fallthru
      _
    // Predicated region
    $region10: #{tpu_custom_call.1} parent=1 // pred_check
      _
    $region11: #{tpu_custom_call.1} parent=1 // pred_check_branch
      %26 = sbr.rel (0) target = $region13
    $region12: #{tpu_custom_call.1} parent=1 // pred_region
      %s28 = ssub.s32 2048, 2048
      %29 = vsyncadd [#allocation4], %s28
      %s30 = sshll.u32 [#allocation3], 4
      %s31 = int_to_ptr.vmem [resolvable:$true] %s30
      %36 = dma.hbm_to_vmem [thread:$0]  %s2, 2048, %s31, [#allocation4], 256, 256, 16
    $region13: #{tpu_custom_call.1} parent=1 // pred_fallthru
      _
    // Predicated region
    $region14: #{tpu_custom_call.1} parent=1 // pred_check
      _
    $region15: #{tpu_custom_call.1} parent=1 // pred_check_branch
      %38 = sbr.rel (0) target = $region17
    $region16: #{tpu_custom_call.1} parent=1 // pred_region
      _
    $region17: #{tpu_custom_call.1} parent=1 // pred_fallthru
      _
    // Predicated region
    $region18: #{tpu_custom_call.1} parent=1 // pred_check
      _
    $region19: #{tpu_custom_call.1} parent=1 // pred_check_branch
      %40 = sbr.rel (0) target = $region21
    $region20: #{tpu_custom_call.1} parent=1 // pred_region
      %s42 = ssub.s32 4096, 4096
      %43 = vsyncadd [#allocation7], %s42
      %s44 = sshll.u32 [#allocation6], 4
      %s45 = int_to_ptr.vmem [resolvable:$true] %s44
      %50 = dma.hbm_to_vmem [thread:$0]  %s4, 4096, %s45, [#allocation7], 256, 256, 16
    $region21: #{tpu_custom_call.1} parent=1 // pred_fallthru
      _
    // Predicated region
    $region22: #{tpu_custom_call.1} parent=1 // pred_check
      _
    $region23: #{tpu_custom_call.1} parent=1 // pred_check_branch
      %52 = sbr.rel (0) target = $region25
    $region24: #{tpu_custom_call.1} parent=1 // pred_region
      %s54 = ssub.s32 2048, 2048
      %55 = vsyncadd [#allocation7], %s54
      %s56 = sshll.u32 [#allocation8], 4
      %s57 = int_to_ptr.vmem [resolvable:$true] %s56
      %62 = dma.hbm_to_vmem [thread:$0]  %s5, 2048, %s57, [#allocation7], 256, 256, 16
    $region25: #{tpu_custom_call.1} parent=1 // pred_fallthru
      _
    // Predicated region
    $region26: #{tpu_custom_call.1} parent=1 // pred_check
      _
    $region27: #{tpu_custom_call.1} parent=1 // pred_check_branch
      %64 = sbr.rel (0) target = $region29
    $region28: #{tpu_custom_call.1} parent=1 // pred_region
      _
    $region29: #{tpu_custom_call.1} parent=1 // pred_fallthru
      _
    // Predicated region
    $region30: #{tpu_custom_call.1} parent=1 // pred_check
      _
    $region31: #{tpu_custom_call.1} parent=1 // pred_check_branch
      %66 = sbr.rel (0) target = $region33
    $region32: #{tpu_custom_call.1} parent=1 // pred_region
      _
    $region33: #{tpu_custom_call.1} parent=1 // pred_fallthru
      _
    // Predicated region
    $region34: #{tpu_custom_call.1} parent=1 // pred_check
      _
    $region35: #{tpu_custom_call.1} parent=1 // pred_check_branch
      %68 = sbr.rel (0) target = $region37
    $region36: #{tpu_custom_call.1} parent=1 // pred_region
      _
    $region37: #{tpu_custom_call.1} parent=1 // pred_fallthru
      _
    // Predicated region
    $region38: #{tpu_custom_call.1} parent=1 // pred_check
      _
    $region39: #{tpu_custom_call.1} parent=1 // pred_check_branch
      %70 = sbr.rel (0) target = $region41
    $region40: #{tpu_custom_call.1} parent=1 // pred_region
      _
    $region41: #{tpu_custom_call.1} parent=1 // pred_fallthru
      _
    // Predicated region
    $region42: #{tpu_custom_call.1} parent=1 // pred_check
      _
    $region43: #{tpu_custom_call.1} parent=1 // pred_check_branch
      %72 = sbr.rel (0) target = $region45
    $region44: #{tpu_custom_call.1} parent=1 // pred_region
      _
    $region45: #{tpu_custom_call.1} parent=1 // pred_fallthru
      _
    // Predicated region
    $region46: #{tpu_custom_call.1} parent=1 // pred_check
      _
    $region47: #{tpu_custom_call.1} parent=1 // pred_check_branch
      %74 = sbr.rel (0) target = $region49
    $region48: #{tpu_custom_call.1} parent=1 // pred_region
      %75 = dma.done [#allocation4], 2048
    $region49: #{tpu_custom_call.1} parent=1 // pred_fallthru
      _
    // Predicated region
    $region50: #{tpu_custom_call.1} parent=1 // pred_check
      _
    $region51: #{tpu_custom_call.1} parent=1 // pred_check_branch
      %77 = sbr.rel (0) target = $region53
    $region52: #{tpu_custom_call.1} parent=1 // pred_region
      %78 = dma.done [#allocation7], 4096
    $region53: #{tpu_custom_call.1} parent=1 // pred_fallthru
      _
    // Predicated region
    $region54: #{tpu_custom_call.1} parent=1 // pred_check
      _
    $region55: #{tpu_custom_call.1} parent=1 // pred_check_branch
      %80 = sbr.rel (0) target = $region57
    $region56: #{tpu_custom_call.1} parent=1 // pred_region
      %81 = dma.done [#allocation7], 2048
    $region57: #{tpu_custom_call.1} parent=1 // pred_fallthru
      _
    %v82 = vld [vmem:[%s0] sm:$0xff]
    %v83 = vld [vmem:[%s0 + $0x8] sm:$0xff]
    %v84 = vld [vmem:[%s1] sm:$0xff]
    %v85 = vld [vmem:[%s1 + $0x8] sm:$0xff]
    %v86 = vld [vmem:[%s1 + $0x10] sm:$0xff]
    %v87 = vld [vmem:[%s1 + $0x18] sm:$0xff]
    %v88 = vld [vmem:[%s1 + $0x20] sm:$0xff]
    %v89 = vld [vmem:[%s1 + $0x28] sm:$0xff]
    %v90 = vld [vmem:[%s1 + $0x30] sm:$0xff]
    %v91 = vld [vmem:[%s1 + $0x38] sm:$0xff]
    %v92 = vld [vmem:[%s1 + $0x40] sm:$0xff]
    %v93 = vld [vmem:[%s1 + $0x48] sm:$0xff]
    %v94 = vld [vmem:[%s1 + $0x50] sm:$0xff]
    %v95 = vld [vmem:[%s1 + $0x58] sm:$0xff]
    %v96 = vld [vmem:[%s1 + $0x60] sm:$0xff]
    %v97 = vld [vmem:[%s1 + $0x68] sm:$0xff]
    %v98 = vld [vmem:[%s1 + $0x70] sm:$0xff]
    %v99 = vld [vmem:[%s1 + $0x78] sm:$0xff]
    %v100 = vld [vmem:[%s3] sm:$0x3]
    %v102 = vlaneseq
    %v103 = vshrl.u32 %v102, 7
    %v104 = vsub.s32 0, %v103
    %v105 = vrot.slane %v100, %v104
    %v106 = vlaneseq
    %v107 = vshrl.u32 %v106, 7
    %v108 = vsub.s32 1, %v107
    %v109 = vrot.slane %v100, %v108
    %vm112 = vcmask 523264
    %v114 = vsel %vm112, %v82, 0
    %v117 = vsel %vm112, %v83, 0
    %119 = vmatprep.subr.mxu0 0.0
    %120 = vmatpush1.msra.mxu0 0.0
    %121 = vmatprep.subr.mxu0 0.0
    %122 = vmatpush1.msra.mxu0 0.0
    %123 = vmatprep.subr.mxu0 0.0
    %124 = vmatpush1.msra.mxu0 0.0
    %125 = vmatprep.subr.mxu0 0.0
    %126 = vmatpush1.msra.mxu0 0.0
    %127 = vmatprep.subr.mxu0 0.0
    %128 = vmatpush1.msra.mxu0 0.0
    %129 = vmatprep.subr.mxu0 0.0
    %130 = vmatpush1.msra.mxu0 0.0
    %131 = vmatprep.subr.mxu0 0.0
    %132 = vmatpush1.msra.mxu0 0.0
    %133 = vmatprep.subr.mxu0 0.0
    %134 = vmatpush1.msra.mxu0 0.0
    %135 = vmatprep.subr.mxu0 %v99
    %136 = vmatpush1.msra.mxu0 %v98
    %137 = vmatprep.subr.mxu0 %v97
    %138 = vmatpush1.msra.mxu0 %v96
    %139 = vmatprep.subr.mxu0 %v95
    %140 = vmatpush1.msra.mxu0 %v94
    %141 = vmatprep.subr.mxu0 %v93
    %142 = vmatpush1.msra.mxu0 %v92
    %143 = vmatprep.subr.mxu0 %v91
    %144 = vmatpush1.msra.mxu0 %v90
    %145 = vmatprep.subr.mxu0 %v89
    %146 = vmatpush1.msra.mxu0 %v88
    %147 = vmatprep.subr.mxu0 %v87
    %148 = vmatpush1.msra.mxu0 %v86
    %149 = vmatprep.subr.mxu0 %v85
    %150 = vmatpush1.msra.mxu0 %v84
    %151 = vmatprep.subr.mxu0 0.0
    %152 = vmatpush2.msra.mxu0 0.0
    %153 = vmatprep.subr.mxu0 0.0
    %154 = vmatpush2.msra.mxu0 0.0
    %155 = vmatprep.subr.mxu0 0.0
    %156 = vmatpush2.msra.mxu0 0.0
    %157 = vmatprep.subr.mxu0 0.0
    %158 = vmatpush2.msra.mxu0 0.0
    %159 = vmatprep.subr.mxu0 0.0
    %160 = vmatpush2.msra.mxu0 0.0
    %161 = vmatprep.subr.mxu0 0.0
    %162 = vmatpush2.msra.mxu0 0.0
    %163 = vmatprep.subr.mxu0 0.0
    %164 = vmatpush2.msra.mxu0 0.0
    %165 = vmatprep.subr.mxu0 0.0
    %166 = vmatpush2.msra.mxu0 0.0
    %167 = vmatprep.subr.mxu0 0.0
    %168 = vmatpush2.msra.mxu0 0.0
    %169 = vmatprep.subr.mxu0 0.0
    %170 = vmatpush2.msra.mxu0 0.0
    %171 = vmatprep.subr.mxu0 0.0
    %172 = vmatpush2.msra.mxu0 0.0
    %173 = vmatprep.subr.mxu0 0.0
    %174 = vmatpush2.msra.mxu0 0.0
    %175 = vmatprep.subr.mxu0 0.0
    %176 = vmatpush2.msra.mxu0 0.0
    %177 = vmatprep.subr.mxu0 0.0
    %178 = vmatpush2.msra.mxu0 0.0
    %179 = vmatprep.subr.mxu0 0.0
    %180 = vmatpush2.msra.mxu0 0.0
    %181 = vmatprep.subr.mxu0 0.0
    %182 = vmatpush2.msra.mxu0 0.0
    %183 = vmatprep.mubr.f32.mxu0 0.0
    %184 = vmatmul.mubr.f32.gmra.mxu0 %v114
    %v185 = vpop.f32.mrf.mxu0
    %v186 = vadd.f32 %v105, %v185
    %v187 = vpop.f32.mrf.mxu0
    %v188 = vadd.f32 %v109, %v187
    %189 = vmatprep.mubr.f32.mxu0 0.0
    %190 = vmatmul.mubr.f32.gmra.mxu0 %v117
    %v191 = vpop.f32.mrf.mxu0
    %v192 = vadd.f32 %v105, %v191
    %v193 = vpop.f32.mrf.mxu0
    %v194 = vadd.f32 %v109, %v193
    %195 = vdwg.mxu0
    %v196 = vld [vmem:[#allocation3] sm:$0xff]
    %v197 = vld [vmem:[#allocation3 + $0x8] sm:$0xff]
    %v198 = vld [vmem:[#allocation3 + $0x10] sm:$0xff]
    %v199 = vld [vmem:[#allocation3 + $0x18] sm:$0xff]
    %v200 = vld [vmem:[#allocation3 + $0x20] sm:$0xff]
    %v201 = vld [vmem:[#allocation3 + $0x28] sm:$0xff]
    %v202 = vld [vmem:[#allocation3 + $0x30] sm:$0xff]
    %v203 = vld [vmem:[#allocation3 + $0x38] sm:$0xff]
    %v204 = vld [vmem:[#allocation3 + $0x40] sm:$0xff]
    %v205 = vld [vmem:[#allocation3 + $0x48] sm:$0xff]
    %v206 = vld [vmem:[#allocation3 + $0x50] sm:$0xff]
    %v207 = vld [vmem:[#allocation3 + $0x58] sm:$0xff]
    %v208 = vld [vmem:[#allocation3 + $0x60] sm:$0xff]
    %v209 = vld [vmem:[#allocation3 + $0x68] sm:$0xff]
    %v210 = vld [vmem:[#allocation3 + $0x70] sm:$0xff]
    %v211 = vld [vmem:[#allocation3 + $0x78] sm:$0xff]
    %v213 = vsel %vm112, 0.0, 0
    %215 = vmatprep.subr.mxu0 0.0
    %216 = vmatpush1.msra.mxu0 0.0
    %217 = vmatprep.subr.mxu0 0.0
    %218 = vmatpush1.msra.mxu0 0.0
    %219 = vmatprep.subr.mxu0 0.0
    %220 = vmatpush1.msra.mxu0 0.0
    %221 = vmatprep.subr.mxu0 0.0
    %222 = vmatpush1.msra.mxu0 0.0
    %223 = vmatprep.subr.mxu0 0.0
    %224 = vmatpush1.msra.mxu0 0.0
    %225 = vmatprep.subr.mxu0 0.0
    %226 = vmatpush1.msra.mxu0 0.0
    %227 = vmatprep.subr.mxu0 0.0
    %228 = vmatpush1.msra.mxu0 0.0
    %229 = vmatprep.subr.mxu0 0.0
    %230 = vmatpush1.msra.mxu0 0.0
    %231 = vmatprep.subr.mxu0 %v211
    %232 = vmatpush1.msra.mxu0 %v210
    %233 = vmatprep.subr.mxu0 %v209
    %234 = vmatpush1.msra.mxu0 %v208
    %235 = vmatprep.subr.mxu0 %v207
    %236 = vmatpush1.msra.mxu0 %v206
    %237 = vmatprep.subr.mxu0 %v205
    %238 = vmatpush1.msra.mxu0 %v204
    %239 = vmatprep.subr.mxu0 %v203
    %240 = vmatpush1.msra.mxu0 %v202
    %241 = vmatprep.subr.mxu0 %v201
    %242 = vmatpush1.msra.mxu0 %v200
    %243 = vmatprep.subr.mxu0 %v199
    %244 = vmatpush1.msra.mxu0 %v198
    %245 = vmatprep.subr.mxu0 %v197
    %246 = vmatpush1.msra.mxu0 %v196
    %247 = vmatprep.subr.mxu0 0.0
    %248 = vmatpush2.msra.mxu0 0.0
    %249 = vmatprep.subr.mxu0 0.0
    %250 = vmatpush2.msra.mxu0 0.0
    %251 = vmatprep.subr.mxu0 0.0
    %252 = vmatpush2.msra.mxu0 0.0
    %253 = vmatprep.subr.mxu0 0.0
    %254 = vmatpush2.msra.mxu0 0.0
    %255 = vmatprep.subr.mxu0 0.0
    %256 = vmatpush2.msra.mxu0 0.0
    %257 = vmatprep.subr.mxu0 0.0
    %258 = vmatpush2.msra.mxu0 0.0
    %259 = vmatprep.subr.mxu0 0.0
    %260 = vmatpush2.msra.mxu0 0.0
    %261 = vmatprep.subr.mxu0 0.0
    %262 = vmatpush2.msra.mxu0 0.0
    %263 = vmatprep.subr.mxu0 0.0
    %264 = vmatpush2.msra.mxu0 0.0
    %265 = vmatprep.subr.mxu0 0.0
    %266 = vmatpush2.msra.mxu0 0.0
    %267 = vmatprep.subr.mxu0 0.0
    %268 = vmatpush2.msra.mxu0 0.0
    %269 = vmatprep.subr.mxu0 0.0
    %270 = vmatpush2.msra.mxu0 0.0
    %271 = vmatprep.subr.mxu0 0.0
    %272 = vmatpush2.msra.mxu0 0.0
    %273 = vmatprep.subr.mxu0 0.0
    %274 = vmatpush2.msra.mxu0 0.0
    %275 = vmatprep.subr.mxu0 0.0
    %276 = vmatpush2.msra.mxu0 0.0
    %277 = vmatprep.subr.mxu0 0.0
    %278 = vmatpush2.msra.mxu0 0.0
    %279 = vmatprep.mubr.f32.mxu0 0.0
    %280 = vmatmul.mubr.f32.gmra.mxu0 %v213
    %v281 = vpop.f32.mrf.mxu0
    %v282 = vadd.f32 0.0, %v281
    %v283 = vpop.f32.mrf.mxu0
    %v284 = vadd.f32 0.0, %v283
    %285 = vdwg.mxu0
    %v286 = vadd.f32 %v186, %v282
    %v287 = vadd.f32 %v188, %v284
    %v288 = vxor.u32 %v286, 2147483648
    %v289 = vxor.u32 %v287, 2147483648
    %v290 = vmul.f32 %v288, 1.442695
    %v291 = vpow.pop %v290
    %v292 = vmul.f32 %v289, 1.442695
    %v293 = vpow.pop %v292
    %v294 = vadd.f32 %v291, 1.0
    %v295 = vadd.f32 %v293, 1.0
    %v296 = vrcp.pop %v294
    %v297 = vmul.f32 1.0, %v296
    %v298 = vrcp.pop %v295
    %v299 = vmul.f32 1.0, %v298
    %v300 = vtanh.pop %v287
    %v301 = vmul.f32 %v297, 0.0
    %v302 = vmul.f32 %v297, %v300
    %304 = vrot.lane.b32.xlu0 %v302, 64
    %v305 = vpop.permute.xlu0 %304
    %v307 = vadd.f32 %v301, %v305
    %v308 = vtanh.pop %v307
    %v309 = vmul.f32 %v299, %v308
    %311 = vrot.lane.b32.xlu0 %v309, 64
    %v312 = vpop.permute.xlu0 %311
    %v313 = vsel %vm112, %v312, 0
    %315 = vmatprep.subr.mxu0 0.0
    %316 = vmatpush1.msra.mxu0 0.0
    %317 = vmatprep.subr.mxu0 0.0
    %318 = vmatpush1.msra.mxu0 0.0
    %319 = vmatprep.subr.mxu0 0.0
    %320 = vmatpush1.msra.mxu0 0.0
    %321 = vmatprep.subr.mxu0 0.0
    %322 = vmatpush1.msra.mxu0 0.0
    %323 = vmatprep.subr.mxu0 0.0
    %324 = vmatpush1.msra.mxu0 0.0
    %325 = vmatprep.subr.mxu0 0.0
    %326 = vmatpush1.msra.mxu0 0.0
    %327 = vmatprep.subr.mxu0 0.0
    %328 = vmatpush1.msra.mxu0 0.0
    %329 = vmatprep.subr.mxu0 0.0
    %330 = vmatpush1.msra.mxu0 0.0
    %331 = vmatprep.subr.mxu0 %v211
    %332 = vmatpush1.msra.mxu0 %v210
    %333 = vmatprep.subr.mxu0 %v209
    %334 = vmatpush1.msra.mxu0 %v208
    %335 = vmatprep.subr.mxu0 %v207
    %336 = vmatpush1.msra.mxu0 %v206
    %337 = vmatprep.subr.mxu0 %v205
    %338 = vmatpush1.msra.mxu0 %v204
    %339 = vmatprep.subr.mxu0 %v203
    %340 = vmatpush1.msra.mxu0 %v202
    %341 = vmatprep.subr.mxu0 %v201
    %342 = vmatpush1.msra.mxu0 %v200
    %343 = vmatprep.subr.mxu0 %v199
    %344 = vmatpush1.msra.mxu0 %v198
    %345 = vmatprep.subr.mxu0 %v197
    %346 = vmatpush1.msra.mxu0 %v196
    %347 = vmatprep.subr.mxu0 0.0
    %348 = vmatpush2.msra.mxu0 0.0
    %349 = vmatprep.subr.mxu0 0.0
    %350 = vmatpush2.msra.mxu0 0.0
    %351 = vmatprep.subr.mxu0 0.0
    %352 = vmatpush2.msra.mxu0 0.0
    %353 = vmatprep.subr.mxu0 0.0
    %354 = vmatpush2.msra.mxu0 0.0
    %355 = vmatprep.subr.mxu0 0.0
    %356 = vmatpush2.msra.mxu0 0.0
    %357 = vmatprep.subr.mxu0 0.0
    %358 = vmatpush2.msra.mxu0 0.0
    %359 = vmatprep.subr.mxu0 0.0
    %360 = vmatpush2.msra.mxu0 0.0
    %361 = vmatprep.subr.mxu0 0.0
    %362 = vmatpush2.msra.mxu0 0.0
    %363 = vmatprep.subr.mxu0 0.0
    %364 = vmatpush2.msra.mxu0 0.0
    %365 = vmatprep.subr.mxu0 0.0
    %366 = vmatpush2.msra.mxu0 0.0
    %367 = vmatprep.subr.mxu0 0.0
    %368 = vmatpush2.msra.mxu0 0.0
    %369 = vmatprep.subr.mxu0 0.0
    %370 = vmatpush2.msra.mxu0 0.0
    %371 = vmatprep.subr.mxu0 0.0
    %372 = vmatpush2.msra.mxu0 0.0
    %373 = vmatprep.subr.mxu0 0.0
    %374 = vmatpush2.msra.mxu0 0.0
    %375 = vmatprep.subr.mxu0 0.0
    %376 = vmatpush2.msra.mxu0 0.0
    %377 = vmatprep.subr.mxu0 0.0
    %378 = vmatpush2.msra.mxu0 0.0
    %379 = vmatprep.mubr.f32.mxu0 0.0
    %380 = vmatmul.mubr.f32.gmra.mxu0 %v313
    %v381 = vpop.f32.mrf.mxu0
    %v382 = vadd.f32 0.0, %v381
    %v383 = vpop.f32.mrf.mxu0
    %v384 = vadd.f32 0.0, %v383
    %385 = vdwg.mxu0
    %v388 = vrot.slane %v382, 6
    %v389 = vrot.slane %v384, 6
    %v392 = vadd.f32 %v186, %v388
    %v393 = vadd.f32 %v188, %v389
    %v394 = vxor.u32 %v392, 2147483648
    %v395 = vxor.u32 %v393, 2147483648
    %v396 = vmul.f32 %v394, 1.442695
    %v397 = vpow.pop %v396
    %v398 = vmul.f32 %v395, 1.442695
    %v399 = vpow.pop %v398
    %v400 = vadd.f32 %v397, 1.0
    %v401 = vadd.f32 %v399, 1.0
    %v402 = vrcp.pop %v400
    %v403 = vmul.f32 1.0, %v402
    %v404 = vrcp.pop %v401
    %v405 = vmul.f32 1.0, %v404
    %v406 = vtanh.pop %v393
    %v408 = vrot.slane %v307, 6
    %v410 = vmul.f32 %v403, %v408
    %v411 = vmul.f32 %v403, %v406
    %413 = vrot.lane.b32.xlu0 %v411, 64
    %v414 = vpop.permute.xlu0 %413
    %v416 = vadd.f32 %v410, %v414
    %v417 = vtanh.pop %v416
    %v418 = vmul.f32 %v405, %v417
    %v420 = vrot.slane %v418, 2
    %421 = vrot.lane.b32.xlu0 %v420, 64
    %v422 = vpop.permute.xlu0 %421
    %v423 = vsel %vm112, %v422, 0
    %425 = vmatprep.subr.mxu0 0.0
    %426 = vmatpush1.msra.mxu0 0.0
    %427 = vmatprep.subr.mxu0 0.0
    %428 = vmatpush1.msra.mxu0 0.0
    %429 = vmatprep.subr.mxu0 0.0
    %430 = vmatpush1.msra.mxu0 0.0
    %431 = vmatprep.subr.mxu0 0.0
    %432 = vmatpush1.msra.mxu0 0.0
    %433 = vmatprep.subr.mxu0 0.0
    %434 = vmatpush1.msra.mxu0 0.0
    %435 = vmatprep.subr.mxu0 0.0
    %436 = vmatpush1.msra.mxu0 0.0
    %437 = vmatprep.subr.mxu0 0.0
    %438 = vmatpush1.msra.mxu0 0.0
    %439 = vmatprep.subr.mxu0 0.0
    %440 = vmatpush1.msra.mxu0 0.0
    %441 = vmatprep.subr.mxu0 %v211
    %442 = vmatpush1.msra.mxu0 %v210
    %443 = vmatprep.subr.mxu0 %v209
    %444 = vmatpush1.msra.mxu0 %v208
    %445 = vmatprep.subr.mxu0 %v207
    %446 = vmatpush1.msra.mxu0 %v206
    %447 = vmatprep.subr.mxu0 %v205
    %448 = vmatpush1.msra.mxu0 %v204
    %449 = vmatprep.subr.mxu0 %v203
    %450 = vmatpush1.msra.mxu0 %v202
    %451 = vmatprep.subr.mxu0 %v201
    %452 = vmatpush1.msra.mxu0 %v200
    %453 = vmatprep.subr.mxu0 %v199
    %454 = vmatpush1.msra.mxu0 %v198
    %455 = vmatprep.subr.mxu0 %v197
    %456 = vmatpush1.msra.mxu0 %v196
    %457 = vmatprep.subr.mxu0 0.0
    %458 = vmatpush2.msra.mxu0 0.0
    %459 = vmatprep.subr.mxu0 0.0
    %460 = vmatpush2.msra.mxu0 0.0
    %461 = vmatprep.subr.mxu0 0.0
    %462 = vmatpush2.msra.mxu0 0.0
    %463 = vmatprep.subr.mxu0 0.0
    %464 = vmatpush2.msra.mxu0 0.0
    %465 = vmatprep.subr.mxu0 0.0
    %466 = vmatpush2.msra.mxu0 0.0
    %467 = vmatprep.subr.mxu0 0.0
    %468 = vmatpush2.msra.mxu0 0.0
    %469 = vmatprep.subr.mxu0 0.0
    %470 = vmatpush2.msra.mxu0 0.0
    %471 = vmatprep.subr.mxu0 0.0
    %472 = vmatpush2.msra.mxu0 0.0
    %473 = vmatprep.subr.mxu0 0.0
    %474 = vmatpush2.msra.mxu0 0.0
    %475 = vmatprep.subr.mxu0 0.0
    %476 = vmatpush2.msra.mxu0 0.0
    %477 = vmatprep.subr.mxu0 0.0
    %478 = vmatpush2.msra.mxu0 0.0
    %479 = vmatprep.subr.mxu0 0.0
    %480 = vmatpush2.msra.mxu0 0.0
    %481 = vmatprep.subr.mxu0 0.0
    %482 = vmatpush2.msra.mxu0 0.0
    %483 = vmatprep.subr.mxu0 0.0
    %484 = vmatpush2.msra.mxu0 0.0
    %485 = vmatprep.subr.mxu0 0.0
    %486 = vmatpush2.msra.mxu0 0.0
    %487 = vmatprep.subr.mxu0 0.0
    %488 = vmatpush2.msra.mxu0 0.0
    %489 = vmatprep.mubr.f32.mxu0 0.0
    %490 = vmatmul.mubr.f32.gmra.mxu0 %v423
    %v491 = vpop.f32.mrf.mxu0
    %v492 = vadd.f32 0.0, %v491
    %v493 = vpop.f32.mrf.mxu0
    %v494 = vadd.f32 0.0, %v493
    %495 = vdwg.mxu0
    %v498 = vrot.slane %v492, 4
    %v499 = vrot.slane %v494, 4
    %v502 = vadd.f32 %v186, %v498
    %v503 = vadd.f32 %v188, %v499
    %v504 = vxor.u32 %v502, 2147483648
    %v505 = vxor.u32 %v503, 2147483648
    %v506 = vmul.f32 %v504, 1.442695
    %v507 = vpow.pop %v506
    %v508 = vmul.f32 %v505, 1.442695
    %v509 = vpow.pop %v508
    %v510 = vadd.f32 %v507, 1.0
    %v511 = vadd.f32 %v509, 1.0
    %v512 = vrcp.pop %v510
    %v513 = vmul.f32 1.0, %v512
    %v514 = vrcp.pop %v511
    %v515 = vmul.f32 1.0, %v514
    %v516 = vtanh.pop %v503
    %v518 = vrot.slane %v416, 6
    %v520 = vmul.f32 %v513, %v518
    %v521 = vmul.f32 %v513, %v516
    %523 = vrot.lane.b32.xlu0 %v521, 64
    %v524 = vpop.permute.xlu0 %523
    %v526 = vadd.f32 %v520, %v524
    %v527 = vtanh.pop %v526
    %v528 = vmul.f32 %v515, %v527
    %v530 = vrot.slane %v528, 4
    %531 = vrot.lane.b32.xlu0 %v530, 64
    %v532 = vpop.permute.xlu0 %531
    %v533 = vsel %vm112, %v532, 0
    %535 = vmatprep.subr.mxu0 0.0
    %536 = vmatpush1.msra.mxu0 0.0
    %537 = vmatprep.subr.mxu0 0.0
    %538 = vmatpush1.msra.mxu0 0.0
    %539 = vmatprep.subr.mxu0 0.0
    %540 = vmatpush1.msra.mxu0 0.0
    %541 = vmatprep.subr.mxu0 0.0
    %542 = vmatpush1.msra.mxu0 0.0
    %543 = vmatprep.subr.mxu0 0.0
    %544 = vmatpush1.msra.mxu0 0.0
    %545 = vmatprep.subr.mxu0 0.0
    %546 = vmatpush1.msra.mxu0 0.0
    %547 = vmatprep.subr.mxu0 0.0
    %548 = vmatpush1.msra.mxu0 0.0
    %549 = vmatprep.subr.mxu0 0.0
    %550 = vmatpush1.msra.mxu0 0.0
    %551 = vmatprep.subr.mxu0 %v211
    %552 = vmatpush1.msra.mxu0 %v210
    %553 = vmatprep.subr.mxu0 %v209
    %554 = vmatpush1.msra.mxu0 %v208
    %555 = vmatprep.subr.mxu0 %v207
    %556 = vmatpush1.msra.mxu0 %v206
    %557 = vmatprep.subr.mxu0 %v205
    %558 = vmatpush1.msra.mxu0 %v204
    %559 = vmatprep.subr.mxu0 %v203
    %560 = vmatpush1.msra.mxu0 %v202
    %561 = vmatprep.subr.mxu0 %v201
    %562 = vmatpush1.msra.mxu0 %v200
    %563 = vmatprep.subr.mxu0 %v199
    %564 = vmatpush1.msra.mxu0 %v198
    %565 = vmatprep.subr.mxu0 %v197
    %566 = vmatpush1.msra.mxu0 %v196
    %567 = vmatprep.subr.mxu0 0.0
    %568 = vmatpush2.msra.mxu0 0.0
    %569 = vmatprep.subr.mxu0 0.0
    %570 = vmatpush2.msra.mxu0 0.0
    %571 = vmatprep.subr.mxu0 0.0
    %572 = vmatpush2.msra.mxu0 0.0
    %573 = vmatprep.subr.mxu0 0.0
    %574 = vmatpush2.msra.mxu0 0.0
    %575 = vmatprep.subr.mxu0 0.0
    %576 = vmatpush2.msra.mxu0 0.0
    %577 = vmatprep.subr.mxu0 0.0
    %578 = vmatpush2.msra.mxu0 0.0
    %579 = vmatprep.subr.mxu0 0.0
    %580 = vmatpush2.msra.mxu0 0.0
    %581 = vmatprep.subr.mxu0 0.0
    %582 = vmatpush2.msra.mxu0 0.0
    %583 = vmatprep.subr.mxu0 0.0
    %584 = vmatpush2.msra.mxu0 0.0
    %585 = vmatprep.subr.mxu0 0.0
    %586 = vmatpush2.msra.mxu0 0.0
    %587 = vmatprep.subr.mxu0 0.0
    %588 = vmatpush2.msra.mxu0 0.0
    %589 = vmatprep.subr.mxu0 0.0
    %590 = vmatpush2.msra.mxu0 0.0
    %591 = vmatprep.subr.mxu0 0.0
    %592 = vmatpush2.msra.mxu0 0.0
    %593 = vmatprep.subr.mxu0 0.0
    %594 = vmatpush2.msra.mxu0 0.0
    %595 = vmatprep.subr.mxu0 0.0
    %596 = vmatpush2.msra.mxu0 0.0
    %597 = vmatprep.subr.mxu0 0.0
    %598 = vmatpush2.msra.mxu0 0.0
    %599 = vmatprep.mubr.f32.mxu0 0.0
    %600 = vmatmul.mubr.f32.gmra.mxu0 %v533
    %v601 = vpop.f32.mrf.mxu0
    %v602 = vadd.f32 0.0, %v601
    %v603 = vpop.f32.mrf.mxu0
    %v604 = vadd.f32 0.0, %v603
    %605 = vdwg.mxu0
    %v608 = vrot.slane %v602, 2
    %v609 = vrot.slane %v604, 2
    %v612 = vadd.f32 %v186, %v608
    %v613 = vadd.f32 %v188, %v609
    %v614 = vxor.u32 %v612, 2147483648
    %v615 = vxor.u32 %v613, 2147483648
    %v616 = vmul.f32 %v614, 1.442695
    %v617 = vpow.pop %v616
    %v618 = vmul.f32 %v615, 1.442695
    %v619 = vpow.pop %v618
    %v620 = vadd.f32 %v617, 1.0
    %v621 = vadd.f32 %v619, 1.0
    %v622 = vrcp.pop %v620
    %v623 = vmul.f32 1.0, %v622
    %v624 = vrcp.pop %v621
    %v625 = vmul.f32 1.0, %v624
    %v626 = vtanh.pop %v613
    %v628 = vrot.slane %v526, 6
    %v630 = vmul.f32 %v623, %v628
    %v631 = vmul.f32 %v623, %v626
    %633 = vrot.lane.b32.xlu0 %v631, 64
    %v634 = vpop.permute.xlu0 %633
    %v636 = vadd.f32 %v630, %v634
    %v637 = vtanh.pop %v636
    %v638 = vmul.f32 %v625, %v637
    %v640 = vrot.slane %v638, 6
    %641 = vrot.lane.b32.xlu0 %v640, 64
    %v642 = vpop.permute.xlu0 %641
    %v643 = vsel %vm112, %v642, 0
    %645 = vmatprep.subr.mxu0 0.0
    %646 = vmatpush1.msra.mxu0 0.0
    %647 = vmatprep.subr.mxu0 0.0
    %648 = vmatpush1.msra.mxu0 0.0
    %649 = vmatprep.subr.mxu0 0.0
    %650 = vmatpush1.msra.mxu0 0.0
    %651 = vmatprep.subr.mxu0 0.0
    %652 = vmatpush1.msra.mxu0 0.0
    %653 = vmatprep.subr.mxu0 0.0
    %654 = vmatpush1.msra.mxu0 0.0
    %655 = vmatprep.subr.mxu0 0.0
    %656 = vmatpush1.msra.mxu0 0.0
    %657 = vmatprep.subr.mxu0 0.0
    %658 = vmatpush1.msra.mxu0 0.0
    %659 = vmatprep.subr.mxu0 0.0
    %660 = vmatpush1.msra.mxu0 0.0
    %661 = vmatprep.subr.mxu0 %v211
    %662 = vmatpush1.msra.mxu0 %v210
    %663 = vmatprep.subr.mxu0 %v209
    %664 = vmatpush1.msra.mxu0 %v208
    %665 = vmatprep.subr.mxu0 %v207
    %666 = vmatpush1.msra.mxu0 %v206
    %667 = vmatprep.subr.mxu0 %v205
    %668 = vmatpush1.msra.mxu0 %v204
    %669 = vmatprep.subr.mxu0 %v203
    %670 = vmatpush1.msra.mxu0 %v202
    %671 = vmatprep.subr.mxu0 %v201
    %672 = vmatpush1.msra.mxu0 %v200
    %673 = vmatprep.subr.mxu0 %v199
    %674 = vmatpush1.msra.mxu0 %v198
    %675 = vmatprep.subr.mxu0 %v197
    %676 = vmatpush1.msra.mxu0 %v196
    %677 = vmatprep.subr.mxu0 0.0
    %678 = vmatpush2.msra.mxu0 0.0
    %679 = vmatprep.subr.mxu0 0.0
    %680 = vmatpush2.msra.mxu0 0.0
    %681 = vmatprep.subr.mxu0 0.0
    %682 = vmatpush2.msra.mxu0 0.0
    %683 = vmatprep.subr.mxu0 0.0
    %684 = vmatpush2.msra.mxu0 0.0
    %685 = vmatprep.subr.mxu0 0.0
    %686 = vmatpush2.msra.mxu0 0.0
    %687 = vmatprep.subr.mxu0 0.0
    %688 = vmatpush2.msra.mxu0 0.0
    %689 = vmatprep.subr.mxu0 0.0
    %690 = vmatpush2.msra.mxu0 0.0
    %691 = vmatprep.subr.mxu0 0.0
    %692 = vmatpush2.msra.mxu0 0.0
    %693 = vmatprep.subr.mxu0 0.0
    %694 = vmatpush2.msra.mxu0 0.0
    %695 = vmatprep.subr.mxu0 0.0
    %696 = vmatpush2.msra.mxu0 0.0
    %697 = vmatprep.subr.mxu0 0.0
    %698 = vmatpush2.msra.mxu0 0.0
    %699 = vmatprep.subr.mxu0 0.0
    %700 = vmatpush2.msra.mxu0 0.0
    %701 = vmatprep.subr.mxu0 0.0
    %702 = vmatpush2.msra.mxu0 0.0
    %703 = vmatprep.subr.mxu0 0.0
    %704 = vmatpush2.msra.mxu0 0.0
    %705 = vmatprep.subr.mxu0 0.0
    %706 = vmatpush2.msra.mxu0 0.0
    %707 = vmatprep.subr.mxu0 0.0
    %708 = vmatpush2.msra.mxu0 0.0
    %709 = vmatprep.mubr.f32.mxu0 0.0
    %710 = vmatmul.mubr.f32.gmra.mxu0 %v643
    %v711 = vpop.f32.mrf.mxu0
    %v712 = vadd.f32 0.0, %v711
    %v713 = vpop.f32.mrf.mxu0
    %v714 = vadd.f32 0.0, %v713
    %715 = vdwg.mxu0
    %v716 = vadd.f32 %v192, %v712
    %v717 = vadd.f32 %v194, %v714
    %v718 = vxor.u32 %v716, 2147483648
    %v719 = vxor.u32 %v717, 2147483648
    %v720 = vmul.f32 %v718, 1.442695
    %v721 = vpow.pop %v720
    %v722 = vmul.f32 %v719, 1.442695
    %v723 = vpow.pop %v722
    %v724 = vadd.f32 %v721, 1.0
    %v725 = vadd.f32 %v723, 1.0
    %v726 = vrcp.pop %v724
    %v727 = vmul.f32 1.0, %v726
    %v728 = vrcp.pop %v725
    %v729 = vmul.f32 1.0, %v728
    %v730 = vtanh.pop %v717
    %v732 = vrot.slane %v636, 6
    %v734 = vmul.f32 %v727, %v732
    %v735 = vmul.f32 %v727, %v730
    %737 = vrot.lane.b32.xlu0 %v735, 64
    %v738 = vpop.permute.xlu0 %737
    %v740 = vadd.f32 %v734, %v738
    %v741 = vtanh.pop %v740
    %v742 = vmul.f32 %v729, %v741
    %744 = vrot.lane.b32.xlu0 %v742, 64
    %v745 = vpop.permute.xlu0 %744
    %v746 = vsel %vm112, %v745, 0
    %748 = vmatprep.subr.mxu0 0.0
    %749 = vmatpush1.msra.mxu0 0.0
    %750 = vmatprep.subr.mxu0 0.0
    %751 = vmatpush1.msra.mxu0 0.0
    %752 = vmatprep.subr.mxu0 0.0
    %753 = vmatpush1.msra.mxu0 0.0
    %754 = vmatprep.subr.mxu0 0.0
    %755 = vmatpush1.msra.mxu0 0.0
    %756 = vmatprep.subr.mxu0 0.0
    %757 = vmatpush1.msra.mxu0 0.0
    %758 = vmatprep.subr.mxu0 0.0
    %759 = vmatpush1.msra.mxu0 0.0
    %760 = vmatprep.subr.mxu0 0.0
    %761 = vmatpush1.msra.mxu0 0.0
    %762 = vmatprep.subr.mxu0 0.0
    %763 = vmatpush1.msra.mxu0 0.0
    %764 = vmatprep.subr.mxu0 %v211
    %765 = vmatpush1.msra.mxu0 %v210
    %766 = vmatprep.subr.mxu0 %v209
    %767 = vmatpush1.msra.mxu0 %v208
    %768 = vmatprep.subr.mxu0 %v207
    %769 = vmatpush1.msra.mxu0 %v206
    %770 = vmatprep.subr.mxu0 %v205
    %771 = vmatpush1.msra.mxu0 %v204
    %772 = vmatprep.subr.mxu0 %v203
    %773 = vmatpush1.msra.mxu0 %v202
    %774 = vmatprep.subr.mxu0 %v201
    %775 = vmatpush1.msra.mxu0 %v200
    %776 = vmatprep.subr.mxu0 %v199
    %777 = vmatpush1.msra.mxu0 %v198
    %778 = vmatprep.subr.mxu0 %v197
    %779 = vmatpush1.msra.mxu0 %v196
    %780 = vmatprep.subr.mxu0 0.0
    %781 = vmatpush2.msra.mxu0 0.0
    %782 = vmatprep.subr.mxu0 0.0
    %783 = vmatpush2.msra.mxu0 0.0
    %784 = vmatprep.subr.mxu0 0.0
    %785 = vmatpush2.msra.mxu0 0.0
    %786 = vmatprep.subr.mxu0 0.0
    %787 = vmatpush2.msra.mxu0 0.0
    %788 = vmatprep.subr.mxu0 0.0
    %789 = vmatpush2.msra.mxu0 0.0
    %790 = vmatprep.subr.mxu0 0.0
    %791 = vmatpush2.msra.mxu0 0.0
    %792 = vmatprep.subr.mxu0 0.0
    %793 = vmatpush2.msra.mxu0 0.0
    %794 = vmatprep.subr.mxu0 0.0
    %795 = vmatpush2.msra.mxu0 0.0
    %796 = vmatprep.subr.mxu0 0.0
    %797 = vmatpush2.msra.mxu0 0.0
    %798 = vmatprep.subr.mxu0 0.0
    %799 = vmatpush2.msra.mxu0 0.0
    %800 = vmatprep.subr.mxu0 0.0
    %801 = vmatpush2.msra.mxu0 0.0
    %802 = vmatprep.subr.mxu0 0.0
    %803 = vmatpush2.msra.mxu0 0.0
    %804 = vmatprep.subr.mxu0 0.0
    %805 = vmatpush2.msra.mxu0 0.0
    %806 = vmatprep.subr.mxu0 0.0
    %807 = vmatpush2.msra.mxu0 0.0
    %808 = vmatprep.subr.mxu0 0.0
    %809 = vmatpush2.msra.mxu0 0.0
    %810 = vmatprep.subr.mxu0 0.0
    %811 = vmatpush2.msra.mxu0 0.0
    %812 = vmatprep.mubr.f32.mxu0 0.0
    %813 = vmatmul.mubr.f32.gmra.mxu0 %v746
    %v814 = vpop.f32.mrf.mxu0
    %v815 = vadd.f32 0.0, %v814
    %v816 = vpop.f32.mrf.mxu0
    %v817 = vadd.f32 0.0, %v816
    %818 = vdwg.mxu0
    %v821 = vrot.slane %v815, 6
    %v822 = vrot.slane %v817, 6
    %v825 = vadd.f32 %v192, %v821
    %v826 = vadd.f32 %v194, %v822
    %v827 = vxor.u32 %v825, 2147483648
    %v828 = vxor.u32 %v826, 2147483648
    %v829 = vmul.f32 %v827, 1.442695
    %v830 = vpow.pop %v829
    %v831 = vmul.f32 %v828, 1.442695
    %v832 = vpow.pop %v831
    %v833 = vadd.f32 %v830, 1.0
    %v834 = vadd.f32 %v832, 1.0
    %v835 = vrcp.pop %v833
    %v836 = vmul.f32 1.0, %v835
    %v837 = vrcp.pop %v834
    %v838 = vmul.f32 1.0, %v837
    %v839 = vtanh.pop %v826
    %v841 = vrot.slane %v740, 6
    %v843 = vmul.f32 %v836, %v841
    %v844 = vmul.f32 %v836, %v839
    %846 = vrot.lane.b32.xlu0 %v844, 64
    %v847 = vpop.permute.xlu0 %846
    %v849 = vadd.f32 %v843, %v847
    %v850 = vtanh.pop %v849
    %v851 = vmul.f32 %v838, %v850
    %v853 = vrot.slane %v851, 2
    %854 = vrot.lane.b32.xlu0 %v853, 64
    %v855 = vpop.permute.xlu0 %854
    %v856 = vsel %vm112, %v855, 0
    %858 = vmatprep.subr.mxu0 0.0
    %859 = vmatpush1.msra.mxu0 0.0
    %860 = vmatprep.subr.mxu0 0.0
    %861 = vmatpush1.msra.mxu0 0.0
    %862 = vmatprep.subr.mxu0 0.0
    %863 = vmatpush1.msra.mxu0 0.0
    %864 = vmatprep.subr.mxu0 0.0
    %865 = vmatpush1.msra.mxu0 0.0
    %866 = vmatprep.subr.mxu0 0.0
    %867 = vmatpush1.msra.mxu0 0.0
    %868 = vmatprep.subr.mxu0 0.0
    %869 = vmatpush1.msra.mxu0 0.0
    %870 = vmatprep.subr.mxu0 0.0
    %871 = vmatpush1.msra.mxu0 0.0
    %872 = vmatprep.subr.mxu0 0.0
    %873 = vmatpush1.msra.mxu0 0.0
    %874 = vmatprep.subr.mxu0 %v211
    %875 = vmatpush1.msra.mxu0 %v210
    %876 = vmatprep.subr.mxu0 %v209
    %877 = vmatpush1.msra.mxu0 %v208
    %878 = vmatprep.subr.mxu0 %v207
    %879 = vmatpush1.msra.mxu0 %v206
    %880 = vmatprep.subr.mxu0 %v205
    %881 = vmatpush1.msra.mxu0 %v204
    %882 = vmatprep.subr.mxu0 %v203
    %883 = vmatpush1.msra.mxu0 %v202
    %884 = vmatprep.subr.mxu0 %v201
    %885 = vmatpush1.msra.mxu0 %v200
    %886 = vmatprep.subr.mxu0 %v199
    %887 = vmatpush1.msra.mxu0 %v198
    %888 = vmatprep.subr.mxu0 %v197
    %889 = vmatpush1.msra.mxu0 %v196
    %890 = vmatprep.subr.mxu0 0.0
    %891 = vmatpush2.msra.mxu0 0.0
    %892 = vmatprep.subr.mxu0 0.0
    %893 = vmatpush2.msra.mxu0 0.0
    %894 = vmatprep.subr.mxu0 0.0
    %895 = vmatpush2.msra.mxu0 0.0
    %896 = vmatprep.subr.mxu0 0.0
    %897 = vmatpush2.msra.mxu0 0.0
    %898 = vmatprep.subr.mxu0 0.0
    %899 = vmatpush2.msra.mxu0 0.0
    %900 = vmatprep.subr.mxu0 0.0
    %901 = vmatpush2.msra.mxu0 0.0
    %902 = vmatprep.subr.mxu0 0.0
    %903 = vmatpush2.msra.mxu0 0.0
    %904 = vmatprep.subr.mxu0 0.0
    %905 = vmatpush2.msra.mxu0 0.0
    %906 = vmatprep.subr.mxu0 0.0
    %907 = vmatpush2.msra.mxu0 0.0
    %908 = vmatprep.subr.mxu0 0.0
    %909 = vmatpush2.msra.mxu0 0.0
    %910 = vmatprep.subr.mxu0 0.0
    %911 = vmatpush2.msra.mxu0 0.0
    %912 = vmatprep.subr.mxu0 0.0
    %913 = vmatpush2.msra.mxu0 0.0
    %914 = vmatprep.subr.mxu0 0.0
    %915 = vmatpush2.msra.mxu0 0.0
    %916 = vmatprep.subr.mxu0 0.0
    %917 = vmatpush2.msra.mxu0 0.0
    %918 = vmatprep.subr.mxu0 0.0
    %919 = vmatpush2.msra.mxu0 0.0
    %920 = vmatprep.subr.mxu0 0.0
    %921 = vmatpush2.msra.mxu0 0.0
    %922 = vmatprep.mubr.f32.mxu0 0.0
    %923 = vmatmul.mubr.f32.gmra.mxu0 %v856
    %v924 = vpop.f32.mrf.mxu0
    %v925 = vadd.f32 0.0, %v924
    %v926 = vpop.f32.mrf.mxu0
    %v927 = vadd.f32 0.0, %v926
    %928 = vdwg.mxu0
    %v931 = vrot.slane %v925, 4
    %v932 = vrot.slane %v927, 4
    %v935 = vadd.f32 %v192, %v931
    %v936 = vadd.f32 %v194, %v932
    %v937 = vxor.u32 %v935, 2147483648
    %v938 = vxor.u32 %v936, 2147483648
    %v939 = vmul.f32 %v937, 1.442695
    %v940 = vpow.pop %v939
    %v941 = vmul.f32 %v938, 1.442695
    %v942 = vpow.pop %v941
    %v943 = vadd.f32 %v940, 1.0
    %v944 = vadd.f32 %v942, 1.0
    %v945 = vrcp.pop %v943
    %v946 = vmul.f32 1.0, %v945
    %v947 = vrcp.pop %v944
    %v948 = vmul.f32 1.0, %v947
    %v949 = vtanh.pop %v936
    %v951 = vrot.slane %v849, 6
    %v953 = vmul.f32 %v946, %v951
    %v954 = vmul.f32 %v946, %v949
    %956 = vrot.lane.b32.xlu0 %v954, 64
    %v957 = vpop.permute.xlu0 %956
    %v959 = vadd.f32 %v953, %v957
    %v960 = vtanh.pop %v959
    %v961 = vmul.f32 %v948, %v960
    %v963 = vrot.slane %v961, 4
    %964 = vrot.lane.b32.xlu0 %v963, 64
    %v965 = vpop.permute.xlu0 %964
    %v966 = vsel %vm112, %v965, 0
    %968 = vmatprep.subr.mxu0 0.0
    %969 = vmatpush1.msra.mxu0 0.0
    %970 = vmatprep.subr.mxu0 0.0
    %971 = vmatpush1.msra.mxu0 0.0
    %972 = vmatprep.subr.mxu0 0.0
    %973 = vmatpush1.msra.mxu0 0.0
    %974 = vmatprep.subr.mxu0 0.0
    %975 = vmatpush1.msra.mxu0 0.0
    %976 = vmatprep.subr.mxu0 0.0
    %977 = vmatpush1.msra.mxu0 0.0
    %978 = vmatprep.subr.mxu0 0.0
    %979 = vmatpush1.msra.mxu0 0.0
    %980 = vmatprep.subr.mxu0 0.0
    %981 = vmatpush1.msra.mxu0 0.0
    %982 = vmatprep.subr.mxu0 0.0
    %983 = vmatpush1.msra.mxu0 0.0
    %984 = vmatprep.subr.mxu0 %v211
    %985 = vmatpush1.msra.mxu0 %v210
    %986 = vmatprep.subr.mxu0 %v209
    %987 = vmatpush1.msra.mxu0 %v208
    %988 = vmatprep.subr.mxu0 %v207
    %989 = vmatpush1.msra.mxu0 %v206
    %990 = vmatprep.subr.mxu0 %v205
    %991 = vmatpush1.msra.mxu0 %v204
    %992 = vmatprep.subr.mxu0 %v203
    %993 = vmatpush1.msra.mxu0 %v202
    %994 = vmatprep.subr.mxu0 %v201
    %995 = vmatpush1.msra.mxu0 %v200
    %996 = vmatprep.subr.mxu0 %v199
    %997 = vmatpush1.msra.mxu0 %v198
    %998 = vmatprep.subr.mxu0 %v197
    %999 = vmatpush1.msra.mxu0 %v196
    %1000 = vmatprep.subr.mxu0 0.0
    %1001 = vmatpush2.msra.mxu0 0.0
    %1002 = vmatprep.subr.mxu0 0.0
    %1003 = vmatpush2.msra.mxu0 0.0
    %1004 = vmatprep.subr.mxu0 0.0
    %1005 = vmatpush2.msra.mxu0 0.0
    %1006 = vmatprep.subr.mxu0 0.0
    %1007 = vmatpush2.msra.mxu0 0.0
    %1008 = vmatprep.subr.mxu0 0.0
    %1009 = vmatpush2.msra.mxu0 0.0
    %1010 = vmatprep.subr.mxu0 0.0
    %1011 = vmatpush2.msra.mxu0 0.0
    %1012 = vmatprep.subr.mxu0 0.0
    %1013 = vmatpush2.msra.mxu0 0.0
    %1014 = vmatprep.subr.mxu0 0.0
    %1015 = vmatpush2.msra.mxu0 0.0
    %1016 = vmatprep.subr.mxu0 0.0
    %1017 = vmatpush2.msra.mxu0 0.0
    %1018 = vmatprep.subr.mxu0 0.0
    %1019 = vmatpush2.msra.mxu0 0.0
    %1020 = vmatprep.subr.mxu0 0.0
    %1021 = vmatpush2.msra.mxu0 0.0
    %1022 = vmatprep.subr.mxu0 0.0
    %1023 = vmatpush2.msra.mxu0 0.0
    %1024 = vmatprep.subr.mxu0 0.0
    %1025 = vmatpush2.msra.mxu0 0.0
    %1026 = vmatprep.subr.mxu0 0.0
    %1027 = vmatpush2.msra.mxu0 0.0
    %1028 = vmatprep.subr.mxu0 0.0
    %1029 = vmatpush2.msra.mxu0 0.0
    %1030 = vmatprep.subr.mxu0 0.0
    %1031 = vmatpush2.msra.mxu0 0.0
    %1032 = vmatprep.mubr.f32.mxu0 0.0
    %1033 = vmatmul.mubr.f32.gmra.mxu0 %v966
    %v1034 = vpop.f32.mrf.mxu0
    %v1035 = vadd.f32 0.0, %v1034
    %v1036 = vpop.f32.mrf.mxu0
    %v1037 = vadd.f32 0.0, %v1036
    %1038 = vdwg.mxu0
    %v1041 = vrot.slane %v1035, 2
    %v1042 = vrot.slane %v1037, 2
    %v1045 = vadd.f32 %v192, %v1041
    %v1046 = vadd.f32 %v194, %v1042
    %v1047 = vxor.u32 %v1045, 2147483648
    %v1048 = vxor.u32 %v1046, 2147483648
    %v1049 = vmul.f32 %v1047, 1.442695
    %v1050 = vpow.pop %v1049
    %v1051 = vmul.f32 %v1048, 1.442695
    %v1052 = vpow.pop %v1051
    %v1053 = vadd.f32 %v1050, 1.0
    %v1054 = vadd.f32 %v1052, 1.0
    %v1055 = vrcp.pop %v1053
    %v1056 = vmul.f32 1.0, %v1055
    %v1057 = vrcp.pop %v1054
    %v1058 = vmul.f32 1.0, %v1057
    %v1059 = vtanh.pop %v1046
    %v1061 = vrot.slane %v959, 6
    %v1063 = vmul.f32 %v1056, %v1061
    %v1064 = vmul.f32 %v1056, %v1059
    %1066 = vrot.lane.b32.xlu0 %v1064, 64
    %v1067 = vpop.permute.xlu0 %1066
    %v1069 = vadd.f32 %v1063, %v1067
    %v1070 = vtanh.pop %v1069
    %v1071 = vmul.f32 %v1058, %v1070
    %vm1072 = vcmask 1041408
    %v1073 = vsel %vm1072, %v309, %v418
    %vm1074 = vcmask 1043456
    %v1075 = vsel %vm1074, %v1073, %v528
    %vm1076 = vcmask 1045504
    %v1077 = vsel %vm1076, %v1075, %v638
    %v1078 = vsel %vm1072, %v742, %v851
    %v1079 = vsel %vm1074, %v1078, %v961
    %v1080 = vsel %vm1076, %v1079, %v1071
    %v1082 = vrot.slane %v1071, 6
    %v1084 = vrot.slane %v961, 2
    %v1086 = vrot.slane %v851, 6
    %v1088 = vrot.slane %v742, 2
    %v1091 = vrot.slane %v528, 2
    %v1093 = vrot.slane %v418, 6
    %v1095 = vrot.slane %v309, 2
    %v1097 = vsel %vm1072, %v1082, %v1084
    %v1098 = vsel %vm1074, %v1097, %v1086
    %v1099 = vsel %vm1076, %v1098, %v1088
    %v1100 = vsel %vm1072, %v640, %v1091
    %v1101 = vsel %vm1074, %v1100, %v1093
    %v1102 = vsel %vm1076, %v1101, %v1095
    %1105 = vrot.lane.b32.xlu0 %v1077, 64
    %v1106 = vpop.permute.xlu0 %1105
    %1107 = vrot.lane.b32.xlu0 %v1080, 64
    %v1108 = vpop.permute.xlu0 %1107
    %v1111 = vsel %vm112, %v1106, %v1099
    %v1112 = vsel %vm112, %v1108, %v1102
    %v1113 = vld [vmem:[#allocation6] sm:$0xff]
    %v1114 = vld [vmem:[#allocation6 + $0x8] sm:$0xff]
    %v1115 = vld [vmem:[#allocation6 + $0x10] sm:$0xff]
    %v1116 = vld [vmem:[#allocation6 + $0x18] sm:$0xff]
    %v1117 = vld [vmem:[#allocation6 + $0x20] sm:$0xff]
    %v1118 = vld [vmem:[#allocation6 + $0x28] sm:$0xff]
    %v1119 = vld [vmem:[#allocation6 + $0x30] sm:$0xff]
    %v1120 = vld [vmem:[#allocation6 + $0x38] sm:$0xff]
    %v1121 = vld [vmem:[#allocation6 + $0x40] sm:$0xff]
    %v1122 = vld [vmem:[#allocation6 + $0x48] sm:$0xff]
    %v1123 = vld [vmem:[#allocation6 + $0x50] sm:$0xff]
    %v1124 = vld [vmem:[#allocation6 + $0x58] sm:$0xff]
    %v1125 = vld [vmem:[#allocation6 + $0x60] sm:$0xff]
    %v1126 = vld [vmem:[#allocation6 + $0x68] sm:$0xff]
    %v1127 = vld [vmem:[#allocation6 + $0x70] sm:$0xff]
    %v1128 = vld [vmem:[#allocation6 + $0x78] sm:$0xff]
    %v1129 = vld [vmem:[#allocation6 + $0x80] sm:$0xff]
    %v1130 = vld [vmem:[#allocation6 + $0x88] sm:$0xff]
    %v1131 = vld [vmem:[#allocation6 + $0x90] sm:$0xff]
    %v1132 = vld [vmem:[#allocation6 + $0x98] sm:$0xff]
    %v1133 = vld [vmem:[#allocation6 + $0xa0] sm:$0xff]
    %v1134 = vld [vmem:[#allocation6 + $0xa8] sm:$0xff]
    %v1135 = vld [vmem:[#allocation6 + $0xb0] sm:$0xff]
    %v1136 = vld [vmem:[#allocation6 + $0xb8] sm:$0xff]
    %v1137 = vld [vmem:[#allocation6 + $0xc0] sm:$0xff]
    %v1138 = vld [vmem:[#allocation6 + $0xc8] sm:$0xff]
    %v1139 = vld [vmem:[#allocation6 + $0xd0] sm:$0xff]
    %v1140 = vld [vmem:[#allocation6 + $0xd8] sm:$0xff]
    %v1141 = vld [vmem:[#allocation6 + $0xe0] sm:$0xff]
    %v1142 = vld [vmem:[#allocation6 + $0xe8] sm:$0xff]
    %v1143 = vld [vmem:[#allocation6 + $0xf0] sm:$0xff]
    %v1144 = vld [vmem:[#allocation6 + $0xf8] sm:$0xff]
    %v1145 = vld [vmem:[%s6] sm:$0x3]
    %v1147 = vlaneseq
    %v1148 = vshrl.u32 %v1147, 7
    %v1149 = vsub.s32 0, %v1148
    %v1150 = vrot.slane %v1145, %v1149
    %v1151 = vlaneseq
    %v1152 = vshrl.u32 %v1151, 7
    %v1153 = vsub.s32 1, %v1152
    %v1154 = vrot.slane %v1145, %v1153
    %1157 = vmatprep.subr.mxu0 %v1144
    %1158 = vmatpush1.msra.mxu0 %v1143
    %1159 = vmatprep.subr.mxu0 %v1142
    %1160 = vmatpush1.msra.mxu0 %v1141
    %1161 = vmatprep.subr.mxu0 %v1140
    %1162 = vmatpush1.msra.mxu0 %v1139
    %1163 = vmatprep.subr.mxu0 %v1138
    %1164 = vmatpush1.msra.mxu0 %v1137
    %1165 = vmatprep.subr.mxu0 %v1136
    %1166 = vmatpush1.msra.mxu0 %v1135
    %1167 = vmatprep.subr.mxu0 %v1134
    %1168 = vmatpush1.msra.mxu0 %v1133
    %1169 = vmatprep.subr.mxu0 %v1132
    %1170 = vmatpush1.msra.mxu0 %v1131
    %1171 = vmatprep.subr.mxu0 %v1130
    %1172 = vmatpush1.msra.mxu0 %v1129
    %1173 = vmatprep.subr.mxu0 %v1128
    %1174 = vmatpush1.msra.mxu0 %v1127
    %1175 = vmatprep.subr.mxu0 %v1126
    %1176 = vmatpush1.msra.mxu0 %v1125
    %1177 = vmatprep.subr.mxu0 %v1124
    %1178 = vmatpush1.msra.mxu0 %v1123
    %1179 = vmatprep.subr.mxu0 %v1122
    %1180 = vmatpush1.msra.mxu0 %v1121
    %1181 = vmatprep.subr.mxu0 %v1120
    %1182 = vmatpush1.msra.mxu0 %v1119
    %1183 = vmatprep.subr.mxu0 %v1118
    %1184 = vmatpush1.msra.mxu0 %v1117
    %1185 = vmatprep.subr.mxu0 %v1116
    %1186 = vmatpush1.msra.mxu0 %v1115
    %1187 = vmatprep.subr.mxu0 %v1114
    %1188 = vmatpush1.msra.mxu0 %v1113
    %1189 = vmatprep.subr.mxu0 0.0
    %1190 = vmatpush2.msra.mxu0 0.0
    %1191 = vmatprep.subr.mxu0 0.0
    %1192 = vmatpush2.msra.mxu0 0.0
    %1193 = vmatprep.subr.mxu0 0.0
    %1194 = vmatpush2.msra.mxu0 0.0
    %1195 = vmatprep.subr.mxu0 0.0
    %1196 = vmatpush2.msra.mxu0 0.0
    %1197 = vmatprep.subr.mxu0 0.0
    %1198 = vmatpush2.msra.mxu0 0.0
    %1199 = vmatprep.subr.mxu0 0.0
    %1200 = vmatpush2.msra.mxu0 0.0
    %1201 = vmatprep.subr.mxu0 0.0
    %1202 = vmatpush2.msra.mxu0 0.0
    %1203 = vmatprep.subr.mxu0 0.0
    %1204 = vmatpush2.msra.mxu0 0.0
    %1205 = vmatprep.subr.mxu0 0.0
    %1206 = vmatpush2.msra.mxu0 0.0
    %1207 = vmatprep.subr.mxu0 0.0
    %1208 = vmatpush2.msra.mxu0 0.0
    %1209 = vmatprep.subr.mxu0 0.0
    %1210 = vmatpush2.msra.mxu0 0.0
    %1211 = vmatprep.subr.mxu0 0.0
    %1212 = vmatpush2.msra.mxu0 0.0
    %1213 = vmatprep.subr.mxu0 0.0
    %1214 = vmatpush2.msra.mxu0 0.0
    %1215 = vmatprep.subr.mxu0 0.0
    %1216 = vmatpush2.msra.mxu0 0.0
    %1217 = vmatprep.subr.mxu0 0.0
    %1218 = vmatpush2.msra.mxu0 0.0
    %1219 = vmatprep.subr.mxu0 0.0
    %1220 = vmatpush2.msra.mxu0 0.0
    %1221 = vmatprep.mubr.f32.mxu0 0.0
    %1222 = vmatmul.mubr.f32.gmra.mxu0 %v1111
    %v1223 = vpop.f32.mrf.mxu0
    %v1224 = vadd.f32 %v1150, %v1223
    %v1225 = vpop.f32.mrf.mxu0
    %v1226 = vadd.f32 %v1154, %v1225
    %1227 = vmatprep.mubr.f32.mxu0 0.0
    %1228 = vmatmul.mubr.f32.gmra.mxu0 %v1112
    %v1229 = vpop.f32.mrf.mxu0
    %v1230 = vadd.f32 %v1150, %v1229
    %v1231 = vpop.f32.mrf.mxu0
    %v1232 = vadd.f32 %v1154, %v1231
    %1233 = vdwg.mxu0
    %v1234 = vld [vmem:[#allocation8] sm:$0xff]
    %v1235 = vld [vmem:[#allocation8 + $0x8] sm:$0xff]
    %v1236 = vld [vmem:[#allocation8 + $0x10] sm:$0xff]
    %v1237 = vld [vmem:[#allocation8 + $0x18] sm:$0xff]
    %v1238 = vld [vmem:[#allocation8 + $0x20] sm:$0xff]
    %v1239 = vld [vmem:[#allocation8 + $0x28] sm:$0xff]
    %v1240 = vld [vmem:[#allocation8 + $0x30] sm:$0xff]
    %v1241 = vld [vmem:[#allocation8 + $0x38] sm:$0xff]
    %v1242 = vld [vmem:[#allocation8 + $0x40] sm:$0xff]
    %v1243 = vld [vmem:[#allocation8 + $0x48] sm:$0xff]
    %v1244 = vld [vmem:[#allocation8 + $0x50] sm:$0xff]
    %v1245 = vld [vmem:[#allocation8 + $0x58] sm:$0xff]
    %v1246 = vld [vmem:[#allocation8 + $0x60] sm:$0xff]
    %v1247 = vld [vmem:[#allocation8 + $0x68] sm:$0xff]
    %v1248 = vld [vmem:[#allocation8 + $0x70] sm:$0xff]
    %v1249 = vld [vmem:[#allocation8 + $0x78] sm:$0xff]
    %1250 = vmatprep.subr.mxu0 0.0
    %1251 = vmatpush1.msra.mxu0 0.0
    %1252 = vmatprep.subr.mxu0 0.0
    %1253 = vmatpush1.msra.mxu0 0.0
    %1254 = vmatprep.subr.mxu0 0.0
    %1255 = vmatpush1.msra.mxu0 0.0
    %1256 = vmatprep.subr.mxu0 0.0
    %1257 = vmatpush1.msra.mxu0 0.0
    %1258 = vmatprep.subr.mxu0 0.0
    %1259 = vmatpush1.msra.mxu0 0.0
    %1260 = vmatprep.subr.mxu0 0.0
    %1261 = vmatpush1.msra.mxu0 0.0
    %1262 = vmatprep.subr.mxu0 0.0
    %1263 = vmatpush1.msra.mxu0 0.0
    %1264 = vmatprep.subr.mxu0 0.0
    %1265 = vmatpush1.msra.mxu0 0.0
    %1266 = vmatprep.subr.mxu0 %v1249
    %1267 = vmatpush1.msra.mxu0 %v1248
    %1268 = vmatprep.subr.mxu0 %v1247
    %1269 = vmatpush1.msra.mxu0 %v1246
    %1270 = vmatprep.subr.mxu0 %v1245
    %1271 = vmatpush1.msra.mxu0 %v1244
    %1272 = vmatprep.subr.mxu0 %v1243
    %1273 = vmatpush1.msra.mxu0 %v1242
    %1274 = vmatprep.subr.mxu0 %v1241
    %1275 = vmatpush1.msra.mxu0 %v1240
    %1276 = vmatprep.subr.mxu0 %v1239
    %1277 = vmatpush1.msra.mxu0 %v1238
    %1278 = vmatprep.subr.mxu0 %v1237
    %1279 = vmatpush1.msra.mxu0 %v1236
    %1280 = vmatprep.subr.mxu0 %v1235
    %1281 = vmatpush1.msra.mxu0 %v1234
    %1282 = vmatprep.subr.mxu0 0.0
    %1283 = vmatpush2.msra.mxu0 0.0
    %1284 = vmatprep.subr.mxu0 0.0
    %1285 = vmatpush2.msra.mxu0 0.0
    %1286 = vmatprep.subr.mxu0 0.0
    %1287 = vmatpush2.msra.mxu0 0.0
    %1288 = vmatprep.subr.mxu0 0.0
    %1289 = vmatpush2.msra.mxu0 0.0
    %1290 = vmatprep.subr.mxu0 0.0
    %1291 = vmatpush2.msra.mxu0 0.0
    %1292 = vmatprep.subr.mxu0 0.0
    %1293 = vmatpush2.msra.mxu0 0.0
    %1294 = vmatprep.subr.mxu0 0.0
    %1295 = vmatpush2.msra.mxu0 0.0
    %1296 = vmatprep.subr.mxu0 0.0
    %1297 = vmatpush2.msra.mxu0 0.0
    %1298 = vmatprep.subr.mxu0 0.0
    %1299 = vmatpush2.msra.mxu0 0.0
    %1300 = vmatprep.subr.mxu0 0.0
    %1301 = vmatpush2.msra.mxu0 0.0
    %1302 = vmatprep.subr.mxu0 0.0
    %1303 = vmatpush2.msra.mxu0 0.0
    %1304 = vmatprep.subr.mxu0 0.0
    %1305 = vmatpush2.msra.mxu0 0.0
    %1306 = vmatprep.subr.mxu0 0.0
    %1307 = vmatpush2.msra.mxu0 0.0
    %1308 = vmatprep.subr.mxu0 0.0
    %1309 = vmatpush2.msra.mxu0 0.0
    %1310 = vmatprep.subr.mxu0 0.0
    %1311 = vmatpush2.msra.mxu0 0.0
    %1312 = vmatprep.subr.mxu0 0.0
    %1313 = vmatpush2.msra.mxu0 0.0
    %1314 = vmatprep.mubr.f32.mxu0 0.0
    %1315 = vmatmul.mubr.f32.gmra.mxu0 %v213
    %v1316 = vpop.f32.mrf.mxu0
    %v1317 = vadd.f32 0.0, %v1316
    %v1318 = vpop.f32.mrf.mxu0
    %v1319 = vadd.f32 0.0, %v1318
    %1320 = vdwg.mxu0
    %v1321 = vadd.f32 %v1224, %v1317
    %v1322 = vadd.f32 %v1226, %v1319
    %v1323 = vxor.u32 %v1321, 2147483648
    %v1324 = vxor.u32 %v1322, 2147483648
    %v1325 = vmul.f32 %v1323, 1.442695
    %v1326 = vpow.pop %v1325
    %v1327 = vmul.f32 %v1324, 1.442695
    %v1328 = vpow.pop %v1327
    %v1329 = vadd.f32 %v1326, 1.0
    %v1330 = vadd.f32 %v1328, 1.0
    %v1331 = vrcp.pop %v1329
    %v1332 = vmul.f32 1.0, %v1331
    %v1333 = vrcp.pop %v1330
    %v1334 = vmul.f32 1.0, %v1333
    %v1335 = vtanh.pop %v1322
    %v1336 = vmul.f32 %v1332, 0.0
    %v1337 = vmul.f32 %v1332, %v1335
    %1339 = vrot.lane.b32.xlu0 %v1337, 64
    %v1340 = vpop.permute.xlu0 %1339
    %v1342 = vadd.f32 %v1336, %v1340
    %v1343 = vtanh.pop %v1342
    %v1344 = vmul.f32 %v1334, %v1343
    %1346 = vrot.lane.b32.xlu0 %v1344, 64
    %v1347 = vpop.permute.xlu0 %1346
    %v1348 = vsel %vm112, %v1347, 0
    %1350 = vmatprep.subr.mxu0 0.0
    %1351 = vmatpush1.msra.mxu0 0.0
    %1352 = vmatprep.subr.mxu0 0.0
    %1353 = vmatpush1.msra.mxu0 0.0
    %1354 = vmatprep.subr.mxu0 0.0
    %1355 = vmatpush1.msra.mxu0 0.0
    %1356 = vmatprep.subr.mxu0 0.0
    %1357 = vmatpush1.msra.mxu0 0.0
    %1358 = vmatprep.subr.mxu0 0.0
    %1359 = vmatpush1.msra.mxu0 0.0
    %1360 = vmatprep.subr.mxu0 0.0
    %1361 = vmatpush1.msra.mxu0 0.0
    %1362 = vmatprep.subr.mxu0 0.0
    %1363 = vmatpush1.msra.mxu0 0.0
    %1364 = vmatprep.subr.mxu0 0.0
    %1365 = vmatpush1.msra.mxu0 0.0
    %1366 = vmatprep.subr.mxu0 %v1249
    %1367 = vmatpush1.msra.mxu0 %v1248
    %1368 = vmatprep.subr.mxu0 %v1247
    %1369 = vmatpush1.msra.mxu0 %v1246
    %1370 = vmatprep.subr.mxu0 %v1245
    %1371 = vmatpush1.msra.mxu0 %v1244
    %1372 = vmatprep.subr.mxu0 %v1243
    %1373 = vmatpush1.msra.mxu0 %v1242
    %1374 = vmatprep.subr.mxu0 %v1241
    %1375 = vmatpush1.msra.mxu0 %v1240
    %1376 = vmatprep.subr.mxu0 %v1239
    %1377 = vmatpush1.msra.mxu0 %v1238
    %1378 = vmatprep.subr.mxu0 %v1237
    %1379 = vmatpush1.msra.mxu0 %v1236
    %1380 = vmatprep.subr.mxu0 %v1235
    %1381 = vmatpush1.msra.mxu0 %v1234
    %1382 = vmatprep.subr.mxu0 0.0
    %1383 = vmatpush2.msra.mxu0 0.0
    %1384 = vmatprep.subr.mxu0 0.0
    %1385 = vmatpush2.msra.mxu0 0.0
    %1386 = vmatprep.subr.mxu0 0.0
    %1387 = vmatpush2.msra.mxu0 0.0
    %1388 = vmatprep.subr.mxu0 0.0
    %1389 = vmatpush2.msra.mxu0 0.0
    %1390 = vmatprep.subr.mxu0 0.0
    %1391 = vmatpush2.msra.mxu0 0.0
    %1392 = vmatprep.subr.mxu0 0.0
    %1393 = vmatpush2.msra.mxu0 0.0
    %1394 = vmatprep.subr.mxu0 0.0
    %1395 = vmatpush2.msra.mxu0 0.0
    %1396 = vmatprep.subr.mxu0 0.0
    %1397 = vmatpush2.msra.mxu0 0.0
    %1398 = vmatprep.subr.mxu0 0.0
    %1399 = vmatpush2.msra.mxu0 0.0
    %1400 = vmatprep.subr.mxu0 0.0
    %1401 = vmatpush2.msra.mxu0 0.0
    %1402 = vmatprep.subr.mxu0 0.0
    %1403 = vmatpush2.msra.mxu0 0.0
    %1404 = vmatprep.subr.mxu0 0.0
    %1405 = vmatpush2.msra.mxu0 0.0
    %1406 = vmatprep.subr.mxu0 0.0
    %1407 = vmatpush2.msra.mxu0 0.0
    %1408 = vmatprep.subr.mxu0 0.0
    %1409 = vmatpush2.msra.mxu0 0.0
    %1410 = vmatprep.subr.mxu0 0.0
    %1411 = vmatpush2.msra.mxu0 0.0
    %1412 = vmatprep.subr.mxu0 0.0
    %1413 = vmatpush2.msra.mxu0 0.0
    %1414 = vmatprep.mubr.f32.mxu0 0.0
    %1415 = vmatmul.mubr.f32.gmra.mxu0 %v1348
    %v1416 = vpop.f32.mrf.mxu0
    %v1417 = vadd.f32 0.0, %v1416
    %v1418 = vpop.f32.mrf.mxu0
    %v1419 = vadd.f32 0.0, %v1418
    %1420 = vdwg.mxu0
    %v1423 = vrot.slane %v1417, 6
    %v1424 = vrot.slane %v1419, 6
    %v1427 = vadd.f32 %v1224, %v1423
    %v1428 = vadd.f32 %v1226, %v1424
    %v1429 = vxor.u32 %v1427, 2147483648
    %v1430 = vxor.u32 %v1428, 2147483648
    %v1431 = vmul.f32 %v1429, 1.442695
    %v1432 = vpow.pop %v1431
    %v1433 = vmul.f32 %v1430, 1.442695
    %v1434 = vpow.pop %v1433
    %v1435 = vadd.f32 %v1432, 1.0
    %v1436 = vadd.f32 %v1434, 1.0
    %v1437 = vrcp.pop %v1435
    %v1438 = vmul.f32 1.0, %v1437
    %v1439 = vrcp.pop %v1436
    %v1440 = vmul.f32 1.0, %v1439
    %v1441 = vtanh.pop %v1428
    %v1443 = vrot.slane %v1342, 6
    %v1445 = vmul.f32 %v1438, %v1443
    %v1446 = vmul.f32 %v1438, %v1441
    %1448 = vrot.lane.b32.xlu0 %v1446, 64
    %v1449 = vpop.permute.xlu0 %1448
    %v1451 = vadd.f32 %v1445, %v1449
    %v1452 = vtanh.pop %v1451
    %v1453 = vmul.f32 %v1440, %v1452
    %v1455 = vrot.slane %v1453, 2
    %1456 = vrot.lane.b32.xlu0 %v1455, 64
    %v1457 = vpop.permute.xlu0 %1456
    %v1458 = vsel %vm112, %v1457, 0
    %1460 = vmatprep.subr.mxu0 0.0
    %1461 = vmatpush1.msra.mxu0 0.0
    %1462 = vmatprep.subr.mxu0 0.0
    %1463 = vmatpush1.msra.mxu0 0.0
    %1464 = vmatprep.subr.mxu0 0.0
    %1465 = vmatpush1.msra.mxu0 0.0
    %1466 = vmatprep.subr.mxu0 0.0
    %1467 = vmatpush1.msra.mxu0 0.0
    %1468 = vmatprep.subr.mxu0 0.0
    %1469 = vmatpush1.msra.mxu0 0.0
    %1470 = vmatprep.subr.mxu0 0.0
    %1471 = vmatpush1.msra.mxu0 0.0
    %1472 = vmatprep.subr.mxu0 0.0
    %1473 = vmatpush1.msra.mxu0 0.0
    %1474 = vmatprep.subr.mxu0 0.0
    %1475 = vmatpush1.msra.mxu0 0.0
    %1476 = vmatprep.subr.mxu0 %v1249
    %1477 = vmatpush1.msra.mxu0 %v1248
    %1478 = vmatprep.subr.mxu0 %v1247
    %1479 = vmatpush1.msra.mxu0 %v1246
    %1480 = vmatprep.subr.mxu0 %v1245
    %1481 = vmatpush1.msra.mxu0 %v1244
    %1482 = vmatprep.subr.mxu0 %v1243
    %1483 = vmatpush1.msra.mxu0 %v1242
    %1484 = vmatprep.subr.mxu0 %v1241
    %1485 = vmatpush1.msra.mxu0 %v1240
    %1486 = vmatprep.subr.mxu0 %v1239
    %1487 = vmatpush1.msra.mxu0 %v1238
    %1488 = vmatprep.subr.mxu0 %v1237
    %1489 = vmatpush1.msra.mxu0 %v1236
    %1490 = vmatprep.subr.mxu0 %v1235
    %1491 = vmatpush1.msra.mxu0 %v1234
    %1492 = vmatprep.subr.mxu0 0.0
    %1493 = vmatpush2.msra.mxu0 0.0
    %1494 = vmatprep.subr.mxu0 0.0
    %1495 = vmatpush2.msra.mxu0 0.0
    %1496 = vmatprep.subr.mxu0 0.0
    %1497 = vmatpush2.msra.mxu0 0.0
    %1498 = vmatprep.subr.mxu0 0.0
    %1499 = vmatpush2.msra.mxu0 0.0
    %1500 = vmatprep.subr.mxu0 0.0
    %1501 = vmatpush2.msra.mxu0 0.0
    %1502 = vmatprep.subr.mxu0 0.0
    %1503 = vmatpush2.msra.mxu0 0.0
    %1504 = vmatprep.subr.mxu0 0.0
    %1505 = vmatpush2.msra.mxu0 0.0
    %1506 = vmatprep.subr.mxu0 0.0
    %1507 = vmatpush2.msra.mxu0 0.0
    %1508 = vmatprep.subr.mxu0 0.0
    %1509 = vmatpush2.msra.mxu0 0.0
    %1510 = vmatprep.subr.mxu0 0.0
    %1511 = vmatpush2.msra.mxu0 0.0
    %1512 = vmatprep.subr.mxu0 0.0
    %1513 = vmatpush2.msra.mxu0 0.0
    %1514 = vmatprep.subr.mxu0 0.0
    %1515 = vmatpush2.msra.mxu0 0.0
    %1516 = vmatprep.subr.mxu0 0.0
    %1517 = vmatpush2.msra.mxu0 0.0
    %1518 = vmatprep.subr.mxu0 0.0
    %1519 = vmatpush2.msra.mxu0 0.0
    %1520 = vmatprep.subr.mxu0 0.0
    %1521 = vmatpush2.msra.mxu0 0.0
    %1522 = vmatprep.subr.mxu0 0.0
    %1523 = vmatpush2.msra.mxu0 0.0
    %1524 = vmatprep.mubr.f32.mxu0 0.0
    %1525 = vmatmul.mubr.f32.gmra.mxu0 %v1458
    %v1526 = vpop.f32.mrf.mxu0
    %v1527 = vadd.f32 0.0, %v1526
    %v1528 = vpop.f32.mrf.mxu0
    %v1529 = vadd.f32 0.0, %v1528
    %1530 = vdwg.mxu0
    %v1533 = vrot.slane %v1527, 4
    %v1534 = vrot.slane %v1529, 4
    %v1537 = vadd.f32 %v1224, %v1533
    %v1538 = vadd.f32 %v1226, %v1534
    %v1539 = vxor.u32 %v1537, 2147483648
    %v1540 = vxor.u32 %v1538, 2147483648
    %v1541 = vmul.f32 %v1539, 1.442695
    %v1542 = vpow.pop %v1541
    %v1543 = vmul.f32 %v1540, 1.442695
    %v1544 = vpow.pop %v1543
    %v1545 = vadd.f32 %v1542, 1.0
    %v1546 = vadd.f32 %v1544, 1.0
    %v1547 = vrcp.pop %v1545
    %v1548 = vmul.f32 1.0, %v1547
    %v1549 = vrcp.pop %v1546
    %v1550 = vmul.f32 1.0, %v1549
    %v1551 = vtanh.pop %v1538
    %v1553 = vrot.slane %v1451, 6
    %v1555 = vmul.f32 %v1548, %v1553
    %v1556 = vmul.f32 %v1548, %v1551
    %1558 = vrot.lane.b32.xlu0 %v1556, 64
    %v1559 = vpop.permute.xlu0 %1558
    %v1561 = vadd.f32 %v1555, %v1559
    %v1562 = vtanh.pop %v1561
    %v1563 = vmul.f32 %v1550, %v1562
    %v1565 = vrot.slane %v1563, 4
    %1566 = vrot.lane.b32.xlu0 %v1565, 64
    %v1567 = vpop.permute.xlu0 %1566
    %v1568 = vsel %vm112, %v1567, 0
    %1570 = vmatprep.subr.mxu0 0.0
    %1571 = vmatpush1.msra.mxu0 0.0
    %1572 = vmatprep.subr.mxu0 0.0
    %1573 = vmatpush1.msra.mxu0 0.0
    %1574 = vmatprep.subr.mxu0 0.0
    %1575 = vmatpush1.msra.mxu0 0.0
    %1576 = vmatprep.subr.mxu0 0.0
    %1577 = vmatpush1.msra.mxu0 0.0
    %1578 = vmatprep.subr.mxu0 0.0
    %1579 = vmatpush1.msra.mxu0 0.0
    %1580 = vmatprep.subr.mxu0 0.0
    %1581 = vmatpush1.msra.mxu0 0.0
    %1582 = vmatprep.subr.mxu0 0.0
    %1583 = vmatpush1.msra.mxu0 0.0
    %1584 = vmatprep.subr.mxu0 0.0
    %1585 = vmatpush1.msra.mxu0 0.0
    %1586 = vmatprep.subr.mxu0 %v1249
    %1587 = vmatpush1.msra.mxu0 %v1248
    %1588 = vmatprep.subr.mxu0 %v1247
    %1589 = vmatpush1.msra.mxu0 %v1246
    %1590 = vmatprep.subr.mxu0 %v1245
    %1591 = vmatpush1.msra.mxu0 %v1244
    %1592 = vmatprep.subr.mxu0 %v1243
    %1593 = vmatpush1.msra.mxu0 %v1242
    %1594 = vmatprep.subr.mxu0 %v1241
    %1595 = vmatpush1.msra.mxu0 %v1240
    %1596 = vmatprep.subr.mxu0 %v1239
    %1597 = vmatpush1.msra.mxu0 %v1238
    %1598 = vmatprep.subr.mxu0 %v1237
    %1599 = vmatpush1.msra.mxu0 %v1236
    %1600 = vmatprep.subr.mxu0 %v1235
    %1601 = vmatpush1.msra.mxu0 %v1234
    %1602 = vmatprep.subr.mxu0 0.0
    %1603 = vmatpush2.msra.mxu0 0.0
    %1604 = vmatprep.subr.mxu0 0.0
    %1605 = vmatpush2.msra.mxu0 0.0
    %1606 = vmatprep.subr.mxu0 0.0
    %1607 = vmatpush2.msra.mxu0 0.0
    %1608 = vmatprep.subr.mxu0 0.0
    %1609 = vmatpush2.msra.mxu0 0.0
    %1610 = vmatprep.subr.mxu0 0.0
    %1611 = vmatpush2.msra.mxu0 0.0
    %1612 = vmatprep.subr.mxu0 0.0
    %1613 = vmatpush2.msra.mxu0 0.0
    %1614 = vmatprep.subr.mxu0 0.0
    %1615 = vmatpush2.msra.mxu0 0.0
    %1616 = vmatprep.subr.mxu0 0.0
    %1617 = vmatpush2.msra.mxu0 0.0
    %1618 = vmatprep.subr.mxu0 0.0
    %1619 = vmatpush2.msra.mxu0 0.0
    %1620 = vmatprep.subr.mxu0 0.0
    %1621 = vmatpush2.msra.mxu0 0.0
    %1622 = vmatprep.subr.mxu0 0.0
    %1623 = vmatpush2.msra.mxu0 0.0
    %1624 = vmatprep.subr.mxu0 0.0
    %1625 = vmatpush2.msra.mxu0 0.0
    %1626 = vmatprep.subr.mxu0 0.0
    %1627 = vmatpush2.msra.mxu0 0.0
    %1628 = vmatprep.subr.mxu0 0.0
    %1629 = vmatpush2.msra.mxu0 0.0
    %1630 = vmatprep.subr.mxu0 0.0
    %1631 = vmatpush2.msra.mxu0 0.0
    %1632 = vmatprep.subr.mxu0 0.0
    %1633 = vmatpush2.msra.mxu0 0.0
    %1634 = vmatprep.mubr.f32.mxu0 0.0
    %1635 = vmatmul.mubr.f32.gmra.mxu0 %v1568
    %v1636 = vpop.f32.mrf.mxu0
    %v1637 = vadd.f32 0.0, %v1636
    %v1638 = vpop.f32.mrf.mxu0
    %v1639 = vadd.f32 0.0, %v1638
    %1640 = vdwg.mxu0
    %v1643 = vrot.slane %v1637, 2
    %v1644 = vrot.slane %v1639, 2
    %v1647 = vadd.f32 %v1224, %v1643
    %v1648 = vadd.f32 %v1226, %v1644
    %v1649 = vxor.u32 %v1647, 2147483648
    %v1650 = vxor.u32 %v1648, 2147483648
    %v1651 = vmul.f32 %v1649, 1.442695
    %v1652 = vpow.pop %v1651
    %v1653 = vmul.f32 %v1650, 1.442695
    %v1654 = vpow.pop %v1653
    %v1655 = vadd.f32 %v1652, 1.0
    %v1656 = vadd.f32 %v1654, 1.0
    %v1657 = vrcp.pop %v1655
    %v1658 = vmul.f32 1.0, %v1657
    %v1659 = vrcp.pop %v1656
    %v1660 = vmul.f32 1.0, %v1659
    %v1661 = vtanh.pop %v1648
    %v1663 = vrot.slane %v1561, 6
    %v1665 = vmul.f32 %v1658, %v1663
    %v1666 = vmul.f32 %v1658, %v1661
    %1668 = vrot.lane.b32.xlu0 %v1666, 64
    %v1669 = vpop.permute.xlu0 %1668
    %v1671 = vadd.f32 %v1665, %v1669
    %v1672 = vtanh.pop %v1671
    %v1673 = vmul.f32 %v1660, %v1672
    %v1675 = vrot.slane %v1673, 6
    %1676 = vrot.lane.b32.xlu0 %v1675, 64
    %v1677 = vpop.permute.xlu0 %1676
    %v1678 = vsel %vm112, %v1677, 0
    %1680 = vmatprep.subr.mxu0 0.0
    %1681 = vmatpush1.msra.mxu0 0.0
    %1682 = vmatprep.subr.mxu0 0.0
    %1683 = vmatpush1.msra.mxu0 0.0
    %1684 = vmatprep.subr.mxu0 0.0
    %1685 = vmatpush1.msra.mxu0 0.0
    %1686 = vmatprep.subr.mxu0 0.0
    %1687 = vmatpush1.msra.mxu0 0.0
    %1688 = vmatprep.subr.mxu0 0.0
    %1689 = vmatpush1.msra.mxu0 0.0
    %1690 = vmatprep.subr.mxu0 0.0
    %1691 = vmatpush1.msra.mxu0 0.0
    %1692 = vmatprep.subr.mxu0 0.0
    %1693 = vmatpush1.msra.mxu0 0.0
    %1694 = vmatprep.subr.mxu0 0.0
    %1695 = vmatpush1.msra.mxu0 0.0
    %1696 = vmatprep.subr.mxu0 %v1249
    %1697 = vmatpush1.msra.mxu0 %v1248
    %1698 = vmatprep.subr.mxu0 %v1247
    %1699 = vmatpush1.msra.mxu0 %v1246
    %1700 = vmatprep.subr.mxu0 %v1245
    %1701 = vmatpush1.msra.mxu0 %v1244
    %1702 = vmatprep.subr.mxu0 %v1243
    %1703 = vmatpush1.msra.mxu0 %v1242
    %1704 = vmatprep.subr.mxu0 %v1241
    %1705 = vmatpush1.msra.mxu0 %v1240
    %1706 = vmatprep.subr.mxu0 %v1239
    %1707 = vmatpush1.msra.mxu0 %v1238
    %1708 = vmatprep.subr.mxu0 %v1237
    %1709 = vmatpush1.msra.mxu0 %v1236
    %1710 = vmatprep.subr.mxu0 %v1235
    %1711 = vmatpush1.msra.mxu0 %v1234
    %1712 = vmatprep.subr.mxu0 0.0
    %1713 = vmatpush2.msra.mxu0 0.0
    %1714 = vmatprep.subr.mxu0 0.0
    %1715 = vmatpush2.msra.mxu0 0.0
    %1716 = vmatprep.subr.mxu0 0.0
    %1717 = vmatpush2.msra.mxu0 0.0
    %1718 = vmatprep.subr.mxu0 0.0
    %1719 = vmatpush2.msra.mxu0 0.0
    %1720 = vmatprep.subr.mxu0 0.0
    %1721 = vmatpush2.msra.mxu0 0.0
    %1722 = vmatprep.subr.mxu0 0.0
    %1723 = vmatpush2.msra.mxu0 0.0
    %1724 = vmatprep.subr.mxu0 0.0
    %1725 = vmatpush2.msra.mxu0 0.0
    %1726 = vmatprep.subr.mxu0 0.0
    %1727 = vmatpush2.msra.mxu0 0.0
    %1728 = vmatprep.subr.mxu0 0.0
    %1729 = vmatpush2.msra.mxu0 0.0
    %1730 = vmatprep.subr.mxu0 0.0
    %1731 = vmatpush2.msra.mxu0 0.0
    %1732 = vmatprep.subr.mxu0 0.0
    %1733 = vmatpush2.msra.mxu0 0.0
    %1734 = vmatprep.subr.mxu0 0.0
    %1735 = vmatpush2.msra.mxu0 0.0
    %1736 = vmatprep.subr.mxu0 0.0
    %1737 = vmatpush2.msra.mxu0 0.0
    %1738 = vmatprep.subr.mxu0 0.0
    %1739 = vmatpush2.msra.mxu0 0.0
    %1740 = vmatprep.subr.mxu0 0.0
    %1741 = vmatpush2.msra.mxu0 0.0
    %1742 = vmatprep.subr.mxu0 0.0
    %1743 = vmatpush2.msra.mxu0 0.0
    %1744 = vmatprep.mubr.f32.mxu0 0.0
    %1745 = vmatmul.mubr.f32.gmra.mxu0 %v1678
    %v1746 = vpop.f32.mrf.mxu0
    %v1747 = vadd.f32 0.0, %v1746
    %v1748 = vpop.f32.mrf.mxu0
    %v1749 = vadd.f32 0.0, %v1748
    %1750 = vdwg.mxu0
    %v1751 = vadd.f32 %v1230, %v1747
    %v1752 = vadd.f32 %v1232, %v1749
    %v1753 = vxor.u32 %v1751, 2147483648
    %v1754 = vxor.u32 %v1752, 2147483648
    %v1755 = vmul.f32 %v1753, 1.442695
    %v1756 = vpow.pop %v1755
    %v1757 = vmul.f32 %v1754, 1.442695
    %v1758 = vpow.pop %v1757
    %v1759 = vadd.f32 %v1756, 1.0
    %v1760 = vadd.f32 %v1758, 1.0
    %v1761 = vrcp.pop %v1759
    %v1762 = vmul.f32 1.0, %v1761
    %v1763 = vrcp.pop %v1760
    %v1764 = vmul.f32 1.0, %v1763
    %v1765 = vtanh.pop %v1752
    %v1767 = vrot.slane %v1671, 6
    %v1769 = vmul.f32 %v1762, %v1767
    %v1770 = vmul.f32 %v1762, %v1765
    %1772 = vrot.lane.b32.xlu0 %v1770, 64
    %v1773 = vpop.permute.xlu0 %1772
    %v1775 = vadd.f32 %v1769, %v1773
    %v1776 = vtanh.pop %v1775
    %v1777 = vmul.f32 %v1764, %v1776
    %1779 = vrot.lane.b32.xlu0 %v1777, 64
    %v1780 = vpop.permute.xlu0 %1779
    %v1781 = vsel %vm112, %v1780, 0
    %1783 = vmatprep.subr.mxu0 0.0
    %1784 = vmatpush1.msra.mxu0 0.0
    %1785 = vmatprep.subr.mxu0 0.0
    %1786 = vmatpush1.msra.mxu0 0.0
    %1787 = vmatprep.subr.mxu0 0.0
    %1788 = vmatpush1.msra.mxu0 0.0
    %1789 = vmatprep.subr.mxu0 0.0
    %1790 = vmatpush1.msra.mxu0 0.0
    %1791 = vmatprep.subr.mxu0 0.0
    %1792 = vmatpush1.msra.mxu0 0.0
    %1793 = vmatprep.subr.mxu0 0.0
    %1794 = vmatpush1.msra.mxu0 0.0
    %1795 = vmatprep.subr.mxu0 0.0
    %1796 = vmatpush1.msra.mxu0 0.0
    %1797 = vmatprep.subr.mxu0 0.0
    %1798 = vmatpush1.msra.mxu0 0.0
    %1799 = vmatprep.subr.mxu0 %v1249
    %1800 = vmatpush1.msra.mxu0 %v1248
    %1801 = vmatprep.subr.mxu0 %v1247
    %1802 = vmatpush1.msra.mxu0 %v1246
    %1803 = vmatprep.subr.mxu0 %v1245
    %1804 = vmatpush1.msra.mxu0 %v1244
    %1805 = vmatprep.subr.mxu0 %v1243
    %1806 = vmatpush1.msra.mxu0 %v1242
    %1807 = vmatprep.subr.mxu0 %v1241
    %1808 = vmatpush1.msra.mxu0 %v1240
    %1809 = vmatprep.subr.mxu0 %v1239
    %1810 = vmatpush1.msra.mxu0 %v1238
    %1811 = vmatprep.subr.mxu0 %v1237
    %1812 = vmatpush1.msra.mxu0 %v1236
    %1813 = vmatprep.subr.mxu0 %v1235
    %1814 = vmatpush1.msra.mxu0 %v1234
    %1815 = vmatprep.subr.mxu0 0.0
    %1816 = vmatpush2.msra.mxu0 0.0
    %1817 = vmatprep.subr.mxu0 0.0
    %1818 = vmatpush2.msra.mxu0 0.0
    %1819 = vmatprep.subr.mxu0 0.0
    %1820 = vmatpush2.msra.mxu0 0.0
    %1821 = vmatprep.subr.mxu0 0.0
    %1822 = vmatpush2.msra.mxu0 0.0
    %1823 = vmatprep.subr.mxu0 0.0
    %1824 = vmatpush2.msra.mxu0 0.0
    %1825 = vmatprep.subr.mxu0 0.0
    %1826 = vmatpush2.msra.mxu0 0.0
    %1827 = vmatprep.subr.mxu0 0.0
    %1828 = vmatpush2.msra.mxu0 0.0
    %1829 = vmatprep.subr.mxu0 0.0
    %1830 = vmatpush2.msra.mxu0 0.0
    %1831 = vmatprep.subr.mxu0 0.0
    %1832 = vmatpush2.msra.mxu0 0.0
    %1833 = vmatprep.subr.mxu0 0.0
    %1834 = vmatpush2.msra.mxu0 0.0
    %1835 = vmatprep.subr.mxu0 0.0
    %1836 = vmatpush2.msra.mxu0 0.0
    %1837 = vmatprep.subr.mxu0 0.0
    %1838 = vmatpush2.msra.mxu0 0.0
    %1839 = vmatprep.subr.mxu0 0.0
    %1840 = vmatpush2.msra.mxu0 0.0
    %1841 = vmatprep.subr.mxu0 0.0
    %1842 = vmatpush2.msra.mxu0 0.0
    %1843 = vmatprep.subr.mxu0 0.0
    %1844 = vmatpush2.msra.mxu0 0.0
    %1845 = vmatprep.subr.mxu0 0.0
    %1846 = vmatpush2.msra.mxu0 0.0
    %1847 = vmatprep.mubr.f32.mxu0 0.0
    %1848 = vmatmul.mubr.f32.gmra.mxu0 %v1781
    %v1849 = vpop.f32.mrf.mxu0
    %v1850 = vadd.f32 0.0, %v1849
    %v1851 = vpop.f32.mrf.mxu0
    %v1852 = vadd.f32 0.0, %v1851
    %1853 = vdwg.mxu0
    %v1856 = vrot.slane %v1850, 6
    %v1857 = vrot.slane %v1852, 6
    %v1860 = vadd.f32 %v1230, %v1856
    %v1861 = vadd.f32 %v1232, %v1857
    %v1862 = vxor.u32 %v1860, 2147483648
    %v1863 = vxor.u32 %v1861, 2147483648
    %v1864 = vmul.f32 %v1862, 1.442695
    %v1865 = vpow.pop %v1864
    %v1866 = vmul.f32 %v1863, 1.442695
    %v1867 = vpow.pop %v1866
    %v1868 = vadd.f32 %v1865, 1.0
    %v1869 = vadd.f32 %v1867, 1.0
    %v1870 = vrcp.pop %v1868
    %v1871 = vmul.f32 1.0, %v1870
    %v1872 = vrcp.pop %v1869
    %v1873 = vmul.f32 1.0, %v1872
    %v1874 = vtanh.pop %v1861
    %v1876 = vrot.slane %v1775, 6
    %v1878 = vmul.f32 %v1871, %v1876
    %v1879 = vmul.f32 %v1871, %v1874
    %1881 = vrot.lane.b32.xlu0 %v1879, 64
    %v1882 = vpop.permute.xlu0 %1881
    %v1884 = vadd.f32 %v1878, %v1882
    %v1885 = vtanh.pop %v1884
    %v1886 = vmul.f32 %v1873, %v1885
    %v1888 = vrot.slane %v1886, 2
    %1889 = vrot.lane.b32.xlu0 %v1888, 64
    %v1890 = vpop.permute.xlu0 %1889
    %v1891 = vsel %vm112, %v1890, 0
    %1893 = vmatprep.subr.mxu0 0.0
    %1894 = vmatpush1.msra.mxu0 0.0
    %1895 = vmatprep.subr.mxu0 0.0
    %1896 = vmatpush1.msra.mxu0 0.0
    %1897 = vmatprep.subr.mxu0 0.0
    %1898 = vmatpush1.msra.mxu0 0.0
    %1899 = vmatprep.subr.mxu0 0.0
    %1900 = vmatpush1.msra.mxu0 0.0
    %1901 = vmatprep.subr.mxu0 0.0
    %1902 = vmatpush1.msra.mxu0 0.0
    %1903 = vmatprep.subr.mxu0 0.0
    %1904 = vmatpush1.msra.mxu0 0.0
    %1905 = vmatprep.subr.mxu0 0.0
    %1906 = vmatpush1.msra.mxu0 0.0
    %1907 = vmatprep.subr.mxu0 0.0
    %1908 = vmatpush1.msra.mxu0 0.0
    %1909 = vmatprep.subr.mxu0 %v1249
    %1910 = vmatpush1.msra.mxu0 %v1248
    %1911 = vmatprep.subr.mxu0 %v1247
    %1912 = vmatpush1.msra.mxu0 %v1246
    %1913 = vmatprep.subr.mxu0 %v1245
    %1914 = vmatpush1.msra.mxu0 %v1244
    %1915 = vmatprep.subr.mxu0 %v1243
    %1916 = vmatpush1.msra.mxu0 %v1242
    %1917 = vmatprep.subr.mxu0 %v1241
    %1918 = vmatpush1.msra.mxu0 %v1240
    %1919 = vmatprep.subr.mxu0 %v1239
    %1920 = vmatpush1.msra.mxu0 %v1238
    %1921 = vmatprep.subr.mxu0 %v1237
    %1922 = vmatpush1.msra.mxu0 %v1236
    %1923 = vmatprep.subr.mxu0 %v1235
    %1924 = vmatpush1.msra.mxu0 %v1234
    %1925 = vmatprep.subr.mxu0 0.0
    %1926 = vmatpush2.msra.mxu0 0.0
    %1927 = vmatprep.subr.mxu0 0.0
    %1928 = vmatpush2.msra.mxu0 0.0
    %1929 = vmatprep.subr.mxu0 0.0
    %1930 = vmatpush2.msra.mxu0 0.0
    %1931 = vmatprep.subr.mxu0 0.0
    %1932 = vmatpush2.msra.mxu0 0.0
    %1933 = vmatprep.subr.mxu0 0.0
    %1934 = vmatpush2.msra.mxu0 0.0
    %1935 = vmatprep.subr.mxu0 0.0
    %1936 = vmatpush2.msra.mxu0 0.0
    %1937 = vmatprep.subr.mxu0 0.0
    %1938 = vmatpush2.msra.mxu0 0.0
    %1939 = vmatprep.subr.mxu0 0.0
    %1940 = vmatpush2.msra.mxu0 0.0
    %1941 = vmatprep.subr.mxu0 0.0
    %1942 = vmatpush2.msra.mxu0 0.0
    %1943 = vmatprep.subr.mxu0 0.0
    %1944 = vmatpush2.msra.mxu0 0.0
    %1945 = vmatprep.subr.mxu0 0.0
    %1946 = vmatpush2.msra.mxu0 0.0
    %1947 = vmatprep.subr.mxu0 0.0
    %1948 = vmatpush2.msra.mxu0 0.0
    %1949 = vmatprep.subr.mxu0 0.0
    %1950 = vmatpush2.msra.mxu0 0.0
    %1951 = vmatprep.subr.mxu0 0.0
    %1952 = vmatpush2.msra.mxu0 0.0
    %1953 = vmatprep.subr.mxu0 0.0
    %1954 = vmatpush2.msra.mxu0 0.0
    %1955 = vmatprep.subr.mxu0 0.0
    %1956 = vmatpush2.msra.mxu0 0.0
    %1957 = vmatprep.mubr.f32.mxu0 0.0
    %1958 = vmatmul.mubr.f32.gmra.mxu0 %v1891
    %v1959 = vpop.f32.mrf.mxu0
    %v1960 = vadd.f32 0.0, %v1959
    %v1961 = vpop.f32.mrf.mxu0
    %v1962 = vadd.f32 0.0, %v1961
    %1963 = vdwg.mxu0
    %v1966 = vrot.slane %v1960, 4
    %v1967 = vrot.slane %v1962, 4
    %v1970 = vadd.f32 %v1230, %v1966
    %v1971 = vadd.f32 %v1232, %v1967
    %v1972 = vxor.u32 %v1970, 2147483648
    %v1973 = vxor.u32 %v1971, 2147483648
    %v1974 = vmul.f32 %v1972, 1.442695
    %v1975 = vpow.pop %v1974
    %v1976 = vmul.f32 %v1973, 1.442695
    %v1977 = vpow.pop %v1976
    %v1978 = vadd.f32 %v1975, 1.0
    %v1979 = vadd.f32 %v1977, 1.0
    %v1980 = vrcp.pop %v1978
    %v1981 = vmul.f32 1.0, %v1980
    %v1982 = vrcp.pop %v1979
    %v1983 = vmul.f32 1.0, %v1982
    %v1984 = vtanh.pop %v1971
    %v1986 = vrot.slane %v1884, 6
    %v1988 = vmul.f32 %v1981, %v1986
    %v1989 = vmul.f32 %v1981, %v1984
    %1991 = vrot.lane.b32.xlu0 %v1989, 64
    %v1992 = vpop.permute.xlu0 %1991
    %v1994 = vadd.f32 %v1988, %v1992
    %v1995 = vtanh.pop %v1994
    %v1996 = vmul.f32 %v1983, %v1995
    %v1998 = vrot.slane %v1996, 4
    %1999 = vrot.lane.b32.xlu0 %v1998, 64
    %v2000 = vpop.permute.xlu0 %1999
    %v2001 = vsel %vm112, %v2000, 0
    %2003 = vmatprep.subr.mxu0 0.0
    %2004 = vmatpush1.msra.mxu0 0.0
    %2005 = vmatprep.subr.mxu0 0.0
    %2006 = vmatpush1.msra.mxu0 0.0
    %2007 = vmatprep.subr.mxu0 0.0
    %2008 = vmatpush1.msra.mxu0 0.0
    %2009 = vmatprep.subr.mxu0 0.0
    %2010 = vmatpush1.msra.mxu0 0.0
    %2011 = vmatprep.subr.mxu0 0.0
    %2012 = vmatpush1.msra.mxu0 0.0
    %2013 = vmatprep.subr.mxu0 0.0
    %2014 = vmatpush1.msra.mxu0 0.0
    %2015 = vmatprep.subr.mxu0 0.0
    %2016 = vmatpush1.msra.mxu0 0.0
    %2017 = vmatprep.subr.mxu0 0.0
    %2018 = vmatpush1.msra.mxu0 0.0
    %2019 = vmatprep.subr.mxu0 %v1249
    %2020 = vmatpush1.msra.mxu0 %v1248
    %2021 = vmatprep.subr.mxu0 %v1247
    %2022 = vmatpush1.msra.mxu0 %v1246
    %2023 = vmatprep.subr.mxu0 %v1245
    %2024 = vmatpush1.msra.mxu0 %v1244
    %2025 = vmatprep.subr.mxu0 %v1243
    %2026 = vmatpush1.msra.mxu0 %v1242
    %2027 = vmatprep.subr.mxu0 %v1241
    %2028 = vmatpush1.msra.mxu0 %v1240
    %2029 = vmatprep.subr.mxu0 %v1239
    %2030 = vmatpush1.msra.mxu0 %v1238
    %2031 = vmatprep.subr.mxu0 %v1237
    %2032 = vmatpush1.msra.mxu0 %v1236
    %2033 = vmatprep.subr.mxu0 %v1235
    %2034 = vmatpush1.msra.mxu0 %v1234
    %2035 = vmatprep.subr.mxu0 0.0
    %2036 = vmatpush2.msra.mxu0 0.0
    %2037 = vmatprep.subr.mxu0 0.0
    %2038 = vmatpush2.msra.mxu0 0.0
    %2039 = vmatprep.subr.mxu0 0.0
    %2040 = vmatpush2.msra.mxu0 0.0
    %2041 = vmatprep.subr.mxu0 0.0
    %2042 = vmatpush2.msra.mxu0 0.0
    %2043 = vmatprep.subr.mxu0 0.0
    %2044 = vmatpush2.msra.mxu0 0.0
    %2045 = vmatprep.subr.mxu0 0.0
    %2046 = vmatpush2.msra.mxu0 0.0
    %2047 = vmatprep.subr.mxu0 0.0
    %2048 = vmatpush2.msra.mxu0 0.0
    %2049 = vmatprep.subr.mxu0 0.0
    %2050 = vmatpush2.msra.mxu0 0.0
    %2051 = vmatprep.subr.mxu0 0.0
    %2052 = vmatpush2.msra.mxu0 0.0
    %2053 = vmatprep.subr.mxu0 0.0
    %2054 = vmatpush2.msra.mxu0 0.0
    %2055 = vmatprep.subr.mxu0 0.0
    %2056 = vmatpush2.msra.mxu0 0.0
    %2057 = vmatprep.subr.mxu0 0.0
    %2058 = vmatpush2.msra.mxu0 0.0
    %2059 = vmatprep.subr.mxu0 0.0
    %2060 = vmatpush2.msra.mxu0 0.0
    %2061 = vmatprep.subr.mxu0 0.0
    %2062 = vmatpush2.msra.mxu0 0.0
    %2063 = vmatprep.subr.mxu0 0.0
    %2064 = vmatpush2.msra.mxu0 0.0
    %2065 = vmatprep.subr.mxu0 0.0
    %2066 = vmatpush2.msra.mxu0 0.0
    %2067 = vmatprep.mubr.f32.mxu0 0.0
    %2068 = vmatmul.mubr.f32.gmra.mxu0 %v2001
    %v2069 = vpop.f32.mrf.mxu0
    %v2070 = vadd.f32 0.0, %v2069
    %v2071 = vpop.f32.mrf.mxu0
    %v2072 = vadd.f32 0.0, %v2071
    %2073 = vdwg.mxu0
    %v2076 = vrot.slane %v2070, 2
    %v2077 = vrot.slane %v2072, 2
    %v2080 = vadd.f32 %v1230, %v2076
    %v2081 = vadd.f32 %v1232, %v2077
    %v2082 = vxor.u32 %v2080, 2147483648
    %v2083 = vxor.u32 %v2081, 2147483648
    %v2084 = vmul.f32 %v2082, 1.442695
    %v2085 = vpow.pop %v2084
    %v2086 = vmul.f32 %v2083, 1.442695
    %v2087 = vpow.pop %v2086
    %v2088 = vadd.f32 %v2085, 1.0
    %v2089 = vadd.f32 %v2087, 1.0
    %v2090 = vrcp.pop %v2088
    %v2091 = vmul.f32 1.0, %v2090
    %v2092 = vrcp.pop %v2089
    %v2093 = vmul.f32 1.0, %v2092
    %v2094 = vtanh.pop %v2081
    %v2096 = vrot.slane %v1994, 6
    %v2098 = vmul.f32 %v2091, %v2096
    %v2099 = vmul.f32 %v2091, %v2094
    %2101 = vrot.lane.b32.xlu0 %v2099, 64
    %v2102 = vpop.permute.xlu0 %2101
    %v2104 = vadd.f32 %v2098, %v2102
    %v2105 = vtanh.pop %v2104
    %v2106 = vmul.f32 %v2093, %v2105
    %v2107 = vsel %vm1072, %v1344, %v1453
    %v2108 = vsel %vm1074, %v2107, %v1563
    %v2109 = vsel %vm1076, %v2108, %v1673
    %v2110 = vsel %vm1072, %v1777, %v1886
    %v2111 = vsel %vm1074, %v2110, %v1996
    %v2112 = vsel %vm1076, %v2111, %v2106
    %v2114 = vrot.slane %v2106, 6
    %v2116 = vrot.slane %v1996, 2
    %v2118 = vrot.slane %v1886, 6
    %v2120 = vrot.slane %v1777, 2
    %v2123 = vrot.slane %v1563, 2
    %v2125 = vrot.slane %v1453, 6
    %v2127 = vrot.slane %v1344, 2
    %v2129 = vsel %vm1072, %v2114, %v2116
    %v2130 = vsel %vm1074, %v2129, %v2118
    %v2131 = vsel %vm1076, %v2130, %v2120
    %v2132 = vsel %vm1072, %v1675, %v2123
    %v2133 = vsel %vm1074, %v2132, %v2125
    %v2134 = vsel %vm1076, %v2133, %v2127
    %2137 = vrot.lane.b32.xlu0 %v2109, 64
    %v2138 = vpop.permute.xlu0 %2137
    %2139 = vrot.lane.b32.xlu0 %v2112, 64
    %v2140 = vpop.permute.xlu0 %2139
    %v2143 = vsel %vm112, %v2138, %v2131
    %v2144 = vsel %vm112, %v2140, %v2134
    %v2145 = vld [vmem:[%s7] sm:$0xff]
    %v2146 = vld [vmem:[%s7 + $0x8] sm:$0xff]
    %v2147 = vld [vmem:[%s7 + $0x10] sm:$0xff]
    %v2148 = vld [vmem:[%s7 + $0x18] sm:$0xff]
    %v2149 = vld [vmem:[%s7 + $0x20] sm:$0xff]
    %v2150 = vld [vmem:[%s7 + $0x28] sm:$0xff]
    %v2151 = vld [vmem:[%s7 + $0x30] sm:$0xff]
    %v2152 = vld [vmem:[%s7 + $0x38] sm:$0xff]
    %v2153 = vld [vmem:[%s7 + $0x40] sm:$0xff]
    %v2154 = vld [vmem:[%s7 + $0x48] sm:$0xff]
    %v2155 = vld [vmem:[%s7 + $0x50] sm:$0xff]
    %v2156 = vld [vmem:[%s7 + $0x58] sm:$0xff]
    %v2157 = vld [vmem:[%s7 + $0x60] sm:$0xff]
    %v2158 = vld [vmem:[%s7 + $0x68] sm:$0xff]
    %v2159 = vld [vmem:[%s7 + $0x70] sm:$0xff]
    %v2160 = vld [vmem:[%s7 + $0x78] sm:$0xff]
    %v2161 = vld [vmem:[%s8] sm:$0x1]
    %v2163 = vlaneseq
    %v2164 = vshrl.u32 %v2163, 7
    %v2165 = vsub.s32 0, %v2164
    %v2166 = vrot.slane %v2161, %v2165
    %2168 = vmatprep.subr.mxu0 0.0
    %2169 = vmatpush1.msra.mxu0 %v2160
    %2170 = vmatprep.subr.mxu0 0.0
    %2171 = vmatpush1.msra.mxu0 %v2159
    %2172 = vmatprep.subr.mxu0 0.0
    %2173 = vmatpush1.msra.mxu0 %v2158
    %2174 = vmatprep.subr.mxu0 0.0
    %2175 = vmatpush1.msra.mxu0 %v2157
    %2176 = vmatprep.subr.mxu0 0.0
    %2177 = vmatpush1.msra.mxu0 %v2156
    %2178 = vmatprep.subr.mxu0 0.0
    %2179 = vmatpush1.msra.mxu0 %v2155
    %2180 = vmatprep.subr.mxu0 0.0
    %2181 = vmatpush1.msra.mxu0 %v2154
    %2182 = vmatprep.subr.mxu0 0.0
    %2183 = vmatpush1.msra.mxu0 %v2153
    %2184 = vmatprep.subr.mxu0 0.0
    %2185 = vmatpush1.msra.mxu0 %v2152
    %2186 = vmatprep.subr.mxu0 0.0
    %2187 = vmatpush1.msra.mxu0 %v2151
    %2188 = vmatprep.subr.mxu0 0.0
    %2189 = vmatpush1.msra.mxu0 %v2150
    %2190 = vmatprep.subr.mxu0 0.0
    %2191 = vmatpush1.msra.mxu0 %v2149
    %2192 = vmatprep.subr.mxu0 0.0
    %2193 = vmatpush1.msra.mxu0 %v2148
    %2194 = vmatprep.subr.mxu0 0.0
    %2195 = vmatpush1.msra.mxu0 %v2147
    %2196 = vmatprep.subr.mxu0 0.0
    %2197 = vmatpush1.msra.mxu0 %v2146
    %2198 = vmatprep.subr.mxu0 0.0
    %2199 = vmatpush1.msra.mxu0 %v2145
    %2200 = vmatprep.subr.mxu0 0.0
    %2201 = vmatpush2.msra.mxu0 0.0
    %2202 = vmatprep.subr.mxu0 0.0
    %2203 = vmatpush2.msra.mxu0 0.0
    %2204 = vmatprep.subr.mxu0 0.0
    %2205 = vmatpush2.msra.mxu0 0.0
    %2206 = vmatprep.subr.mxu0 0.0
    %2207 = vmatpush2.msra.mxu0 0.0
    %2208 = vmatprep.subr.mxu0 0.0
    %2209 = vmatpush2.msra.mxu0 0.0
    %2210 = vmatprep.subr.mxu0 0.0
    %2211 = vmatpush2.msra.mxu0 0.0
    %2212 = vmatprep.subr.mxu0 0.0
    %2213 = vmatpush2.msra.mxu0 0.0
    %2214 = vmatprep.subr.mxu0 0.0
    %2215 = vmatpush2.msra.mxu0 0.0
    %2216 = vmatprep.subr.mxu0 0.0
    %2217 = vmatpush2.msra.mxu0 0.0
    %2218 = vmatprep.subr.mxu0 0.0
    %2219 = vmatpush2.msra.mxu0 0.0
    %2220 = vmatprep.subr.mxu0 0.0
    %2221 = vmatpush2.msra.mxu0 0.0
    %2222 = vmatprep.subr.mxu0 0.0
    %2223 = vmatpush2.msra.mxu0 0.0
    %2224 = vmatprep.subr.mxu0 0.0
    %2225 = vmatpush2.msra.mxu0 0.0
    %2226 = vmatprep.subr.mxu0 0.0
    %2227 = vmatpush2.msra.mxu0 0.0
    %2228 = vmatprep.subr.mxu0 0.0
    %2229 = vmatpush2.msra.mxu0 0.0
    %2230 = vmatprep.subr.mxu0 0.0
    %2231 = vmatpush2.msra.mxu0 0.0
    %2232 = vmatprep.mubr.f32.mxu0 0.0
    %2233 = vmatmul.mubr.f32.gmra.mxu0 %v2143
    %v2234 = vpop.f32.mrf.mxu0
    %v2235 = vadd.f32 %v2166, %v2234
    %v2236 = vpop.f32.mrf.mxu0
    %2237 = vmatprep.mubr.f32.mxu0 0.0
    %2238 = vmatmul.mubr.f32.gmra.mxu0 %v2144
    %v2239 = vpop.f32.mrf.mxu0
    %v2240 = vadd.f32 %v2166, %v2239
    %v2241 = vpop.f32.mrf.mxu0
    %2242 = vdwg.mxu0
    %v2243 = vmax.f32 %v2235, 0.0
    %v2244 = vmax.f32 %v2240, 0.0
    %v2245 = vld [vmem:[%s9] sm:$0x1]
    %v2246 = vld [vmem:[#allocation2] sm:$0x1]
    %2248 = vset.pattern.permute.xlu0 0
    %2249 = vperm.xlu0 %2248, %v2246
    %v2250 = vpop.permute.xlu0 %2249
    %v2252 = vlaneseq
    %v2253 = vshrl.u32 %v2252, 7
    %v2254 = vsub.s32 0, %v2253
    %v2255 = vrot.slane %v2250, %v2254
    %vm2256 = vcmask 261120
    %v2258 = vsel %vm2256, %v2245, 0
    %v2261 = vsel %vm2256, %v2243, 0
    %v2264 = vsel %vm2256, %v2244, 0
    %2266 = vmatprep.subr.mxu0 0.0
    %2267 = vmatpush1.xpose.msra.mxu0 0.0
    %2268 = vmatprep.subr.mxu0 0.0
    %2269 = vmatpush1.xpose.msra.mxu0 0.0
    %2270 = vmatprep.subr.mxu0 0.0
    %2271 = vmatpush1.xpose.msra.mxu0 0.0
    %2272 = vmatprep.subr.mxu0 0.0
    %2273 = vmatpush1.xpose.msra.mxu0 0.0
    %2274 = vmatprep.subr.mxu0 0.0
    %2275 = vmatpush1.xpose.msra.mxu0 0.0
    %2276 = vmatprep.subr.mxu0 0.0
    %2277 = vmatpush1.xpose.msra.mxu0 0.0
    %2278 = vmatprep.subr.mxu0 0.0
    %2279 = vmatpush1.xpose.msra.mxu0 0.0
    %2280 = vmatprep.subr.mxu0 0.0
    %2281 = vmatpush1.xpose.msra.mxu0 0.0
    %2282 = vmatprep.subr.mxu0 0.0
    %2283 = vmatpush1.xpose.msra.mxu0 0.0
    %2284 = vmatprep.subr.mxu0 0.0
    %2285 = vmatpush1.xpose.msra.mxu0 0.0
    %2286 = vmatprep.subr.mxu0 0.0
    %2287 = vmatpush1.xpose.msra.mxu0 0.0
    %2288 = vmatprep.subr.mxu0 0.0
    %2289 = vmatpush1.xpose.msra.mxu0 0.0
    %2290 = vmatprep.subr.mxu0 0.0
    %2291 = vmatpush1.xpose.msra.mxu0 0.0
    %2292 = vmatprep.subr.mxu0 0.0
    %2293 = vmatpush1.xpose.msra.mxu0 0.0
    %2294 = vmatprep.subr.mxu0 0.0
    %2295 = vmatpush1.xpose.msra.mxu0 %v2264
    %2296 = vmatprep.subr.mxu0 0.0
    %2297 = vmatpush1.xpose.msra.mxu0 %v2261
    %2298 = vmatprep.subr.mxu0 0.0
    %2299 = vmatpush2.xpose.msra.mxu0 0.0
    %2300 = vmatprep.subr.mxu0 0.0
    %2301 = vmatpush2.xpose.msra.mxu0 0.0
    %2302 = vmatprep.subr.mxu0 0.0
    %2303 = vmatpush2.xpose.msra.mxu0 0.0
    %2304 = vmatprep.subr.mxu0 0.0
    %2305 = vmatpush2.xpose.msra.mxu0 0.0
    %2306 = vmatprep.subr.mxu0 0.0
    %2307 = vmatpush2.xpose.msra.mxu0 0.0
    %2308 = vmatprep.subr.mxu0 0.0
    %2309 = vmatpush2.xpose.msra.mxu0 0.0
    %2310 = vmatprep.subr.mxu0 0.0
    %2311 = vmatpush2.xpose.msra.mxu0 0.0
    %2312 = vmatprep.subr.mxu0 0.0
    %2313 = vmatpush2.xpose.msra.mxu0 0.0
    %2314 = vmatprep.subr.mxu0 0.0
    %2315 = vmatpush2.xpose.msra.mxu0 0.0
    %2316 = vmatprep.subr.mxu0 0.0
    %2317 = vmatpush2.xpose.msra.mxu0 0.0
    %2318 = vmatprep.subr.mxu0 0.0
    %2319 = vmatpush2.xpose.msra.mxu0 0.0
    %2320 = vmatprep.subr.mxu0 0.0
    %2321 = vmatpush2.xpose.msra.mxu0 0.0
    %2322 = vmatprep.subr.mxu0 0.0
    %2323 = vmatpush2.xpose.msra.mxu0 0.0
    %2324 = vmatprep.subr.mxu0 0.0
    %2325 = vmatpush2.xpose.msra.mxu0 0.0
    %2326 = vmatprep.subr.mxu0 0.0
    %2327 = vmatpush2.xpose.msra.mxu0 0.0
    %2328 = vmatprep.subr.mxu0 0.0
    %2329 = vmatpush2.xpose.msra.mxu0 0.0
    %2330 = vmatprep.mubr.f32.mxu0 0.0
    %2331 = vmatmul.mubr.f32.gmra.mxu0 %v2258
    %v2332 = vpop.f32.mrf.mxu0
    %v2333 = vadd.f32 %v2255, %v2332
    %v2334 = vpop.f32.mrf.mxu0
    %2335 = vdwg.mxu0
    %vm2336 = vcmask 122880
    %2337 = vst.msk [vmem:[#allocation9] sm:$0x1] %vm2336, %v2333
    // Predicated region
    $region58: #{tpu_custom_call.1} parent=1 // pred_check
      _
    $region59: #{tpu_custom_call.1} parent=1 // pred_check_branch
      %2339 = sbr.rel (0) target = $region61
    $region60: #{tpu_custom_call.1} parent=1 // pred_region
      %s2341 = ssub.s32 16, 16
      %2342 = vsyncadd [#allocation5], %s2341
      %s2344 = sshll.u32 [#allocation9], 4
      %s2345 = int_to_ptr.vmem [resolvable:$true] %s2344
      %2347 = dma.vmem_to_hbm [thread:$0]  %s2345, 16, %s11, [#allocation5]
    $region61: #{tpu_custom_call.1} parent=1 // pred_fallthru
      _
    // Predicated region
    $region62: #{tpu_custom_call.1} parent=1 // pred_check
      _
    $region63: #{tpu_custom_call.1} parent=1 // pred_check_branch
      %2349 = sbr.rel (0) target = $region65
    $region64: #{tpu_custom_call.1} parent=1 // pred_region
      %2350 = dma.done [#allocation5], 16
    $region65: #{tpu_custom_call.1} parent=1 // pred_fallthru
      _
    %2351 = vsyncpa [#allocation4], 1
    %2352 = vsyncpa [#allocation7], 1
    %2353 = vsyncpa [#allocation5], 1

</llo_original>
